<compile_context>
chip_gen: v7x
topology: tpu7x:2x2x1
jax: 0.10.0
libtpu: 0.0.40
codegen_flags: <defaults>
</compile_context>

<pallas_src>
import functools
import math

import jax
import jax.numpy as jnp
from jax.experimental import pallas as pl
from jax.experimental.pallas import tpu as pltpu


# ---------------------------------------------------------------------------
# Kernel
# ---------------------------------------------------------------------------
def _lstm_cell(gates, c_prev, H):
    """PyTorch LSTM gate order [i, f, g, o]; returns (h, c)."""
    i = jax.nn.sigmoid(gates[:, 0:H])
    f = jax.nn.sigmoid(gates[:, H:2 * H])
    g = jnp.tanh(gates[:, 2 * H:3 * H])
    o = jax.nn.sigmoid(gates[:, 3 * H:4 * H])
    c = f * c_prev + i * g
    h = o * jnp.tanh(c)
    return h, c


def encoder_kernel(g1_ref, wcat_ref, b2_ref,
                   out_ref,
                   h1_ref, c1_ref, h2_ref, c2_ref,
                   *, H1, H2, Tc, unroll):
    """One grid step processes Tc time steps of the pipelined 2-layer LSTM.

    g1_ref : (Tc, B, 4*H1)      precomputed x_t @ Wih1^T + b1
    wcat   : (H1+H2, 4*H1+4*H2) fused recurrent weights
                                 [[Whh1^T, Wih2^T], [0, Whh2^T]]
    b2     : (1, 4*H2)          layer-2 combined bias
    out    : (Tc, B, H2)        layer-2 hidden states (time-major)
    h1/c1/h2/c2 : VMEM scratch carrying LSTM state across grid steps
    """
    step = pl.program_id(0)

    @pl.when(step == 0)
    def _():
        h1_ref[...] = jnp.zeros_like(h1_ref)
        c1_ref[...] = jnp.zeros_like(c1_ref)
        h2_ref[...] = jnp.zeros_like(h2_ref)
        c2_ref[...] = jnp.zeros_like(c2_ref)

    B = h1_ref.shape[0]
    G1 = 4 * H1

    # Hoist weight loads / static slices / bias broadcast out of the time loop.
    wcat = wcat_ref[...]                                   # (H1+H2, 4*H1+4*H2)
    w_hh1 = wcat[:H1, :G1]                                 # (H1, 4*H1)
    w_l2 = wcat[:, G1:]                                    # (H1+H2, 4*H2)
    b2 = jnp.broadcast_to(b2_ref[...], (B, 4 * H2))

    h1 = h1_ref[...]
    c1 = c1_ref[...]
    h2 = h2_ref[...]
    c2 = c2_ref[...]

    # ----- prologue: advance layer 1 to the first step of this chunk --------
    r1 = jnp.dot(h1, w_hh1, preferred_element_type=jnp.float32)
    h1, c1 = _lstm_cell(g1_ref[0] + r1, c1, H1)

    # ----- steady state: one fused MXU matmul per time step -----------------
    def body(j, carry):
        h1, c1, h2, c2 = carry
        cat = jnp.concatenate([h1, h2], axis=1)            # (B, H1+H2)
        r = jnp.dot(cat, wcat, preferred_element_type=jnp.float32)
        r1 = r[:, :G1]                                     # h1_j @ Whh1
        r2 = r[:, G1:]                                     # h1_j @ Wih2 + h2_{j-1} @ Whh2
        # layer 2 at local step j
        h2, c2 = _lstm_cell(r2 + b2, c2, H2)
        out_ref[j] = h2
        # layer 1 at local step j+1
        h1, c1 = _lstm_cell(g1_ref[j + 1] + r1, c1, H1)
        return (h1, c1, h2, c2)

    h1, c1, h2, c2 = jax.lax.fori_loop(0, Tc - 1, body, (h1, c1, h2, c2),
                                       unroll=unroll)

    # ----- epilogue: layer-2 output of the chunk's last step ----------------
    cat = jnp.concatenate([h1, h2], axis=1)
    r2 = jnp.dot(cat, w_l2, preferred_element_type=jnp.float32)
    h2, c2 = _lstm_cell(r2 + b2, c2, H2)
    out_ref[Tc - 1] = h2

    # Persist state for the next chunk.
    h1_ref[...] = h1
    c1_ref[...] = c1
    h2_ref[...] = h2
    c2_ref[...] = c2


# ---------------------------------------------------------------------------
# Padding helpers (make 4*H a multiple of 128 lanes; padded units stay 0)
# ---------------------------------------------------------------------------
def _round_up(x, m):
    return ((x + m - 1) // m) * m


def _pad_gate_cols(w, H, Hp):
    """Zero-pad each of the 4 gate blocks along the last axis from H to Hp."""
    if Hp == H:
        return w
    lead = w.shape[:-1]
    w4 = w.reshape(lead + (4, H))
    w4 = jnp.pad(w4, [(0, 0)] * len(lead) + [(0, 0), (0, Hp - H)])
    return w4.reshape(lead + (4 * Hp,))


def _pad_lstm_params(w_ih_t, w_hh_t, b, H, Hp, in_dim, in_dim_p):
    """Pad transposed LSTM params so hidden size becomes Hp (>= H)."""
    w_ih_t = _pad_gate_cols(w_ih_t, H, Hp)
    w_hh_t = _pad_gate_cols(w_hh_t, H, Hp)
    b = _pad_gate_cols(b, H, Hp)
    if in_dim_p > in_dim:
        w_ih_t = jnp.pad(w_ih_t, [(0, in_dim_p - in_dim), (0, 0)])
    if Hp > H:
        w_hh_t = jnp.pad(w_hh_t, [(0, Hp - H), (0, 0)])
    return w_ih_t, w_hh_t, b


# ---------------------------------------------------------------------------
# Wrapper
# ---------------------------------------------------------------------------
def encoder_forward(x, params, *, time_chunk=32):
    """x: (B, T, F) float32, batch-first like PyTorch. Returns (B, T, embedding_dim)."""
    wih1, whh1, b1, wih2, whh2, b2 = params
    B, T, F = x.shape
    H1 = whh1.shape[0]
    H2 = whh2.shape[0]

    # Pad hidden sizes so 4*H is a multiple of 128 (lane-aligned gate matrices).
    H1p = _round_up(H1, 32)
    H2p = _round_up(H2, 32)

    wih1_p, whh1_p, b1_p = _pad_lstm_params(wih1, whh1, b1, H1, H1p, F, F)
    wih2_p, whh2_p, b2_p = _pad_lstm_params(wih2, whh2, b2, H2, H2p, H1, H1p)

    # Fused recurrent weight: a single MXU push per time step then yields both
    #   h1_t @ Whh1                      (layer-1 recurrence for step t+1) and
    #   h1_t @ Wih2 + h2_{t-1} @ Whh2    (layer-2 gate pre-activation for step t).
    wcat = jnp.concatenate([
        jnp.concatenate([whh1_p, wih2_p], axis=1),                         # (H1p, 4H1p+4H2p)
        jnp.concatenate([jnp.zeros((H2p, 4 * H1p), jnp.float32), whh2_p],  # (H2p, 4H1p+4H2p)
                        axis=1),
    ], axis=0)                                                             # (H1p+H2p, 4H1p+4H2p)

    # Hoist the layer-1 input projection out of the recurrence as one big
    # matmul (time-major result; the transpose is folded into the einsum).
    g1 = jnp.einsum('btf,fg->tbg', x, wih1_p,
                    preferred_element_type=jnp.float32) + b1_p             # (T, B, 4*H1p)

    # Time chunking: pad T to a multiple of Tc (padded steps discarded below).
    Tc = max(1, min(T, time_chunk))
    T_pad = _round_up(T, Tc)
    if T_pad > T:
        g1 = jnp.pad(g1, [(0, T_pad - T), (0, 0), (0, 0)])
    num_chunks = T_pad // Tc

    out_tm = pl.pallas_call(
        functools.partial(encoder_kernel, H1=H1p, H2=H2p, Tc=Tc, unroll=True),
        out_shape=jax.ShapeDtypeStruct((T_pad, B, H2p), jnp.float32),
        grid_spec=pltpu.PrefetchScalarGridSpec(
            num_scalar_prefetch=0,
            grid=(num_chunks,),
            in_specs=[
                pl.BlockSpec((Tc, B, 4 * H1p), lambda i: (i, 0, 0)),          # G1 chunk
                pl.BlockSpec((H1p + H2p, 4 * (H1p + H2p)), lambda i: (0, 0)),  # fused W
                pl.BlockSpec((1, 4 * H2p), lambda i: (0, 0)),                  # b2
            ],
            out_specs=pl.BlockSpec((Tc, B, H2p), lambda i: (i, 0, 0)),
            scratch_shapes=[
                pltpu.VMEM((B, H1p), jnp.float32),  # h1
                pltpu.VMEM((B, H1p), jnp.float32),  # c1
                pltpu.VMEM((B, H2p), jnp.float32),  # h2
                pltpu.VMEM((B, H2p), jnp.float32),  # c2
            ]),
        compiler_params=pltpu.CompilerParams(
            dimension_semantics=("arbitrary",)),   # recurrence: strictly sequential
    )(g1, wcat, b2_p)

    # Drop time / hidden padding and return batch-first, matching PyTorch.
    return jnp.transpose(out_tm[:T, :, :H2], (1, 0, 2))


# ---------------------------------------------------------------------------
# Parameter init + pure-JAX reference
# ---------------------------------------------------------------------------
def init_lstm_params(key, input_size, hidden_size):
    """PyTorch-style init: U(-1/sqrt(H), 1/sqrt(H)); returns transposed weights + combined bias."""
    k = 1.0 / math.sqrt(hidden_size)
    k1, k2, k3, k4 = jax.random.split(key, 4)
    w_ih = jax.random.uniform(k1, (4 * hidden_size, input_size), jnp.float32, -k, k)
    w_hh = jax.random.uniform(k2, (4 * hidden_size, hidden_size), jnp.float32, -k, k)
    b_ih = jax.random.uniform(k3, (4 * hidden_size,), jnp.float32, -k, k)
    b_hh = jax.random.uniform(k4, (4 * hidden_size,), jnp.float32, -k, k)
    return w_ih.T, w_hh.T, (b_ih + b_hh).reshape(1, 4 * hidden_size)


def lstm_layer_ref(x, w_ih_t, w_hh_t, b, H):
    """Pure-JAX reference LSTM (batch_first), zero initial state."""
    B, T, F = x.shape

    def step(carry, x_t):
        h, c = carry
        gates = x_t @ w_ih_t + h @ w_hh_t + b
        i = jax.nn.sigmoid(gates[:, :H])
        f = jax.nn.sigmoid(gates[:, H:2 * H])
        g = jnp.tanh(gates[:, 2 * H:3 * H])
        o = jax.nn.sigmoid(gates[:, 3 * H:])
        c = f * c + i * g
        h = o * jnp.tanh(c)
        return (h, c), h

    h0 = jnp.zeros((B, H), jnp.float32)
    c0 = jnp.zeros((B, H), jnp.float32)
    (_, _), hs = jax.lax.scan(step, (h0, c0), jnp.transpose(x, (1, 0, 2)))
    return jnp.transpose(hs, (1, 0, 2))


if __name__ == "__main__":
    # Small shapes consistent with Encoder(seq_len, n_features, embedding_dim)
    batch, seq_len, n_features, embedding_dim = 2, 8, 8, 16
    hidden_dim = 2 * embedding_dim

    key = jax.random.PRNGKey(0)
    kx, k1, k2 = jax.random.split(key, 3)

    x = jax.random.normal(kx, (batch, seq_len, n_features), jnp.float32)

    wih1, whh1, b1 = init_lstm_params(k1, n_features, hidden_dim)
    wih2, whh2, b2 = init_lstm_params(k2, hidden_dim, embedding_dim)
    params = (wih1, whh1, b1, wih2, whh2, b2)

    out = encoder_forward(x, params)
    out = jax.block_until_ready(out)

    # Correctness check against a pure-JAX stacked-LSTM reference.
    h1_seq = lstm_layer_ref(x, wih1, whh1, b1, hidden_dim)
    ref = lstm_layer_ref(h1_seq, wih2, whh2, b2, embedding_dim)

    assert out.shape == (batch, seq_len, embedding_dim)
    assert jnp.allclose(out, ref, atol=1e-4, rtol=1e-4), \
        f"max abs err = {jnp.max(jnp.abs(out - ref))}"

    print("KERNEL_OK")
</pallas_src>

<mosaic_0001>
module attributes {stable_mosaic.version = 11 : i64} {
  func.func @encoder_kernel(%arg0: i32, %arg1: memref<8x2x128xf32, #tpu.memory_space<vmem>>, %arg2: memref<64x256xf32, #tpu.memory_space<vmem>>, %arg3: memref<1x128xf32, #tpu.memory_space<vmem>>, %arg4: memref<8x2x32xf32, #tpu.memory_space<vmem>>, %arg5: memref<2x32xf32, #tpu.memory_space<vmem>>, %arg6: memref<2x32xf32, #tpu.memory_space<vmem>>, %arg7: memref<2x32xf32, #tpu.memory_space<vmem>>, %arg8: memref<2x32xf32, #tpu.memory_space<vmem>>) attributes {dimension_semantics = [#tpu.dimension_semantics<arbitrary>], iteration_bounds = array<i64: 1>, scalar_prefetch = 0 : i64, scratch_operands = 4 : i64, tpu.core_type = #tpu.core_type<tc>, window_params = [{transform_indices = @transform_0, window_bounds = array<i64: 8, 2, 128>}, {pipeline_mode = #tpu.pipeline_mode<synchronous>, transform_indices = @transform_1, window_bounds = array<i64: 64, 256>}, {pipeline_mode = #tpu.pipeline_mode<synchronous>, transform_indices = @transform_2, window_bounds = array<i64: 1, 128>}, {transform_indices = @transform_3, window_bounds = array<i64: 8, 2, 32>}]} {
    %c0_i32 = arith.constant 0 : i32
    %0 = arith.cmpi eq, %arg0, %c0_i32 : i32
    %1 = arith.extui %0 : i1 to i32
    %c0_i32_0 = arith.constant 0 : i32
    %2 = arith.cmpi ne, %1, %c0_i32_0 : i32
    scf.if %2 {
      %cst_117 = arith.constant 0.000000e+00 : f32
      %525 = vector.broadcast %cst_117 : f32 to vector<2x32xf32>
      %c0_118 = arith.constant 0 : index
      %c0_119 = arith.constant 0 : index
      %526 = vector.load %arg5[%c0_118, %c0_119] : memref<2x32xf32, #tpu.memory_space<vmem>>, vector<2x32xf32>
      tpu.vector_store %arg5[%c0_118, %c0_119], %525 {strides = array<i32>} : memref<2x32xf32, #tpu.memory_space<vmem>>, vector<2x32xf32>,
      %cst_120 = arith.constant 0.000000e+00 : f32
      %527 = vector.broadcast %cst_120 : f32 to vector<2x32xf32>
      %c0_121 = arith.constant 0 : index
      %c0_122 = arith.constant 0 : index
      %528 = vector.load %arg6[%c0_121, %c0_122] : memref<2x32xf32, #tpu.memory_space<vmem>>, vector<2x32xf32>
      tpu.vector_store %arg6[%c0_121, %c0_122], %527 {strides = array<i32>} : memref<2x32xf32, #tpu.memory_space<vmem>>, vector<2x32xf32>,
      %cst_123 = arith.constant 0.000000e+00 : f32
      %529 = vector.broadcast %cst_123 : f32 to vector<2x32xf32>
      %c0_124 = arith.constant 0 : index
      %c0_125 = arith.constant 0 : index
      %530 = vector.load %arg7[%c0_124, %c0_125] : memref<2x32xf32, #tpu.memory_space<vmem>>, vector<2x32xf32>
      tpu.vector_store %arg7[%c0_124, %c0_125], %529 {strides = array<i32>} : memref<2x32xf32, #tpu.memory_space<vmem>>, vector<2x32xf32>,
      %cst_126 = arith.constant 0.000000e+00 : f32
      %531 = vector.broadcast %cst_126 : f32 to vector<2x32xf32>
      %c0_127 = arith.constant 0 : index
      %c0_128 = arith.constant 0 : index
      %532 = vector.load %arg8[%c0_127, %c0_128] : memref<2x32xf32, #tpu.memory_space<vmem>>, vector<2x32xf32>
      tpu.vector_store %arg8[%c0_127, %c0_128], %531 {strides = array<i32>} : memref<2x32xf32, #tpu.memory_space<vmem>>, vector<2x32xf32>,
    } else {
    }
    %c0 = arith.constant 0 : index
    %c0_1 = arith.constant 0 : index
    %3 = vector.load %arg2[%c0, %c0_1] : memref<64x256xf32, #tpu.memory_space<vmem>>, vector<64x256xf32>
    %4 = vector.extract_strided_slice %3 {offsets = [0, 0], sizes = [32, 128], strides = [1, 1]} : vector<64x256xf32> to vector<32x128xf32>
    %5 = vector.extract_strided_slice %3 {offsets = [0, 128], sizes = [64, 128], strides = [1, 1]} : vector<64x256xf32> to vector<64x128xf32>
    %c0_2 = arith.constant 0 : index
    %c0_3 = arith.constant 0 : index
    %6 = vector.load %arg3[%c0_2, %c0_3] : memref<1x128xf32, #tpu.memory_space<vmem>>, vector<1x128xf32>
    %7 = vector.shape_cast %6 : vector<1x128xf32> to vector<1x128xf32>
    %8 = vector.broadcast %7 : vector<1x128xf32> to vector<2x128xf32>
    %c0_4 = arith.constant 0 : index
    %c0_5 = arith.constant 0 : index
    %9 = vector.load %arg5[%c0_4, %c0_5] : memref<2x32xf32, #tpu.memory_space<vmem>>, vector<2x32xf32>
    %c0_6 = arith.constant 0 : index
    %c0_7 = arith.constant 0 : index
    %10 = vector.load %arg6[%c0_6, %c0_7] : memref<2x32xf32, #tpu.memory_space<vmem>>, vector<2x32xf32>
    %c0_8 = arith.constant 0 : index
    %c0_9 = arith.constant 0 : index
    %11 = vector.load %arg7[%c0_8, %c0_9] : memref<2x32xf32, #tpu.memory_space<vmem>>, vector<2x32xf32>
    %c0_10 = arith.constant 0 : index
    %c0_11 = arith.constant 0 : index
    %12 = vector.load %arg8[%c0_10, %c0_11] : memref<2x32xf32, #tpu.memory_space<vmem>>, vector<2x32xf32>
    %cst = arith.constant dense<0.000000e+00> : vector<2x128xf32>
    %13 = tpu.matmul %9, %4, %cst {dimension_numbers = #tpu.dot_dimension_numbers<[1], [0], [0], [1], [0, 0, 1, 1], [], []>} : vector<2x32xf32>, vector<32x128xf32>, vector<2x128xf32> -> vector<2x128xf32>
    %c0_12 = arith.constant 0 : index
    %c0_13 = arith.constant 0 : index
    %c0_14 = arith.constant 0 : index
    %14 = vector.load %arg1[%c0_12, %c0_13, %c0_14] : memref<8x2x128xf32, #tpu.memory_space<vmem>>, vector<1x2x128xf32>
    %15 = vector.shape_cast %14 : vector<1x2x128xf32> to vector<2x128xf32>
    %16 = arith.addf %15, %13 : vector<2x128xf32>
    %17 = vector.extract_strided_slice %16 {offsets = [0, 0], sizes = [2, 32], strides = [1, 1]} : vector<2x128xf32> to vector<2x32xf32>
    %18 = arith.negf %17 : vector<2x32xf32>
    %19 = math.exp %18 : vector<2x32xf32>
    %cst_15 = arith.constant 1.000000e+00 : f32
    %20 = vector.broadcast %cst_15 : f32 to vector<2x32xf32>
    %21 = arith.addf %20, %19 : vector<2x32xf32>
    %22 = arith.divf %20, %21 : vector<2x32xf32>
    %23 = vector.extract_strided_slice %16 {offsets = [0, 32], sizes = [2, 32], strides = [1, 1]} : vector<2x128xf32> to vector<2x32xf32>
    %24 = arith.negf %23 : vector<2x32xf32>
    %25 = math.exp %24 : vector<2x32xf32>
    %cst_16 = arith.constant 1.000000e+00 : f32
    %26 = vector.broadcast %cst_16 : f32 to vector<2x32xf32>
    %27 = arith.addf %26, %25 : vector<2x32xf32>
    %28 = arith.divf %26, %27 : vector<2x32xf32>
    %29 = vector.extract_strided_slice %16 {offsets = [0, 64], sizes = [2, 32], strides = [1, 1]} : vector<2x128xf32> to vector<2x32xf32>
    %30 = math.tanh %29 : vector<2x32xf32>
    %31 = vector.extract_strided_slice %16 {offsets = [0, 96], sizes = [2, 32], strides = [1, 1]} : vector<2x128xf32> to vector<2x32xf32>
    %32 = arith.negf %31 : vector<2x32xf32>
    %33 = math.exp %32 : vector<2x32xf32>
    %cst_17 = arith.constant 1.000000e+00 : f32
    %34 = vector.broadcast %cst_17 : f32 to vector<2x32xf32>
    %35 = arith.addf %34, %33 : vector<2x32xf32>
    %36 = arith.divf %34, %35 : vector<2x32xf32>
    %37 = arith.mulf %28, %10 : vector<2x32xf32>
    %38 = arith.mulf %22, %30 : vector<2x32xf32>
    %39 = arith.addf %37, %38 : vector<2x32xf32>
    %40 = math.tanh %39 : vector<2x32xf32>
    %41 = arith.mulf %36, %40 : vector<2x32xf32>
    %c0_i32_18 = arith.constant 0 : i32
    %42 = tpu.concatenate %41, %11 in 1 : vector<2x32xf32>, vector<2x32xf32> -> vector<2x64xf32>
    %cst_19 = arith.constant dense<0.000000e+00> : vector<2x256xf32>
    %43 = tpu.matmul %42, %3, %cst_19 {dimension_numbers = #tpu.dot_dimension_numbers<[1], [0], [0], [1], [0, 0, 1, 1], [], []>} : vector<2x64xf32>, vector<64x256xf32>, vector<2x256xf32> -> vector<2x256xf32>
    %44 = vector.extract_strided_slice %43 {offsets = [0, 0], sizes = [2, 128], strides = [1, 1]} : vector<2x256xf32> to vector<2x128xf32>
    %45 = vector.extract_strided_slice %43 {offsets = [0, 128], sizes = [2, 128], strides = [1, 1]} : vector<2x256xf32> to vector<2x128xf32>
    %46 = arith.addf %45, %8 : vector<2x128xf32>
    %47 = vector.extract_strided_slice %46 {offsets = [0, 0], sizes = [2, 32], strides = [1, 1]} : vector<2x128xf32> to vector<2x32xf32>
    %48 = arith.negf %47 : vector<2x32xf32>
    %49 = math.exp %48 : vector<2x32xf32>
    %cst_20 = arith.constant 1.000000e+00 : f32
    %50 = vector.broadcast %cst_20 : f32 to vector<2x32xf32>
    %51 = arith.addf %50, %49 : vector<2x32xf32>
    %52 = arith.divf %50, %51 : vector<2x32xf32>
    %53 = vector.extract_strided_slice %46 {offsets = [0, 32], sizes = [2, 32], strides = [1, 1]} : vector<2x128xf32> to vector<2x32xf32>
    %54 = arith.negf %53 : vector<2x32xf32>
    %55 = math.exp %54 : vector<2x32xf32>
    %cst_21 = arith.constant 1.000000e+00 : f32
    %56 = vector.broadcast %cst_21 : f32 to vector<2x32xf32>
    %57 = arith.addf %56, %55 : vector<2x32xf32>
    %58 = arith.divf %56, %57 : vector<2x32xf32>
    %59 = vector.extract_strided_slice %46 {offsets = [0, 64], sizes = [2, 32], strides = [1, 1]} : vector<2x128xf32> to vector<2x32xf32>
    %60 = math.tanh %59 : vector<2x32xf32>
    %61 = vector.extract_strided_slice %46 {offsets = [0, 96], sizes = [2, 32], strides = [1, 1]} : vector<2x128xf32> to vector<2x32xf32>
    %62 = arith.negf %61 : vector<2x32xf32>
    %63 = math.exp %62 : vector<2x32xf32>
    %cst_22 = arith.constant 1.000000e+00 : f32
    %64 = vector.broadcast %cst_22 : f32 to vector<2x32xf32>
    %65 = arith.addf %64, %63 : vector<2x32xf32>
    %66 = arith.divf %64, %65 : vector<2x32xf32>
    %67 = arith.mulf %58, %12 : vector<2x32xf32>
    %68 = arith.mulf %52, %60 : vector<2x32xf32>
    %69 = arith.addf %67, %68 : vector<2x32xf32>
    %70 = math.tanh %69 : vector<2x32xf32>
    %71 = arith.mulf %66, %70 : vector<2x32xf32>
    %72 = arith.index_cast %c0_i32_18 : i32 to index
    %c0_23 = arith.constant 0 : index
    %c0_24 = arith.constant 0 : index
    %73 = vector.load %arg4[%72, %c0_23, %c0_24] : memref<8x2x32xf32, #tpu.memory_space<vmem>>, vector<1x2x32xf32>
    %74 = vector.shape_cast %73 : vector<1x2x32xf32> to vector<2x32xf32>
    %75 = vector.shape_cast %71 : vector<2x32xf32> to vector<1x2x32xf32>
    tpu.vector_store %arg4[%72, %c0_23, %c0_24], %75 {strides = array<i32>} : memref<8x2x32xf32, #tpu.memory_space<vmem>>, vector<1x2x32xf32>,
    %c1_i32 = arith.constant 1 : i32
    %76 = arith.addi %c0_i32_18, %c1_i32 : i32
    %77 = arith.index_cast %76 : i32 to index
    %c0_25 = arith.constant 0 : index
    %c0_26 = arith.constant 0 : index
    %78 = vector.load %arg1[%77, %c0_25, %c0_26] : memref<8x2x128xf32, #tpu.memory_space<vmem>>, vector<1x2x128xf32>
    %79 = vector.shape_cast %78 : vector<1x2x128xf32> to vector<2x128xf32>
    %80 = arith.addf %79, %44 : vector<2x128xf32>
    %81 = vector.extract_strided_slice %80 {offsets = [0, 0], sizes = [2, 32], strides = [1, 1]} : vector<2x128xf32> to vector<2x32xf32>
    %82 = arith.negf %81 : vector<2x32xf32>
    %83 = math.exp %82 : vector<2x32xf32>
    %cst_27 = arith.constant 1.000000e+00 : f32
    %84 = vector.broadcast %cst_27 : f32 to vector<2x32xf32>
    %85 = arith.addf %84, %83 : vector<2x32xf32>
    %86 = arith.divf %84, %85 : vector<2x32xf32>
    %87 = vector.extract_strided_slice %80 {offsets = [0, 32], sizes = [2, 32], strides = [1, 1]} : vector<2x128xf32> to vector<2x32xf32>
    %88 = arith.negf %87 : vector<2x32xf32>
    %89 = math.exp %88 : vector<2x32xf32>
    %cst_28 = arith.constant 1.000000e+00 : f32
    %90 = vector.broadcast %cst_28 : f32 to vector<2x32xf32>
    %91 = arith.addf %90, %89 : vector<2x32xf32>
    %92 = arith.divf %90, %91 : vector<2x32xf32>
    %93 = vector.extract_strided_slice %80 {offsets = [0, 64], sizes = [2, 32], strides = [1, 1]} : vector<2x128xf32> to vector<2x32xf32>
    %94 = math.tanh %93 : vector<2x32xf32>
    %95 = vector.extract_strided_slice %80 {offsets = [0, 96], sizes = [2, 32], strides = [1, 1]} : vector<2x128xf32> to vector<2x32xf32>
    %96 = arith.negf %95 : vector<2x32xf32>
    %97 = math.exp %96 : vector<2x32xf32>
    %cst_29 = arith.constant 1.000000e+00 : f32
    %98 = vector.broadcast %cst_29 : f32 to vector<2x32xf32>
    %99 = arith.addf %98, %97 : vector<2x32xf32>
    %100 = arith.divf %98, %99 : vector<2x32xf32>
    %101 = arith.mulf %92, %39 : vector<2x32xf32>
    %102 = arith.mulf %86, %94 : vector<2x32xf32>
    %103 = arith.addf %101, %102 : vector<2x32xf32>
    %104 = math.tanh %103 : vector<2x32xf32>
    %105 = arith.mulf %100, %104 : vector<2x32xf32>
    %c1_i32_30 = arith.constant 1 : i32
    %106 = tpu.concatenate %105, %71 in 1 : vector<2x32xf32>, vector<2x32xf32> -> vector<2x64xf32>
    %cst_31 = arith.constant dense<0.000000e+00> : vector<2x256xf32>
    %107 = tpu.matmul %106, %3, %cst_31 {dimension_numbers = #tpu.dot_dimension_numbers<[1], [0], [0], [1], [0, 0, 1, 1], [], []>} : vector<2x64xf32>, vector<64x256xf32>, vector<2x256xf32> -> vector<2x256xf32>
    %108 = vector.extract_strided_slice %107 {offsets = [0, 0], sizes = [2, 128], strides = [1, 1]} : vector<2x256xf32> to vector<2x128xf32>
    %109 = vector.extract_strided_slice %107 {offsets = [0, 128], sizes = [2, 128], strides = [1, 1]} : vector<2x256xf32> to vector<2x128xf32>
    %110 = arith.addf %109, %8 : vector<2x128xf32>
    %111 = vector.extract_strided_slice %110 {offsets = [0, 0], sizes = [2, 32], strides = [1, 1]} : vector<2x128xf32> to vector<2x32xf32>
    %112 = arith.negf %111 : vector<2x32xf32>
    %113 = math.exp %112 : vector<2x32xf32>
    %cst_32 = arith.constant 1.000000e+00 : f32
    %114 = vector.broadcast %cst_32 : f32 to vector<2x32xf32>
    %115 = arith.addf %114, %113 : vector<2x32xf32>
    %116 = arith.divf %114, %115 : vector<2x32xf32>
    %117 = vector.extract_strided_slice %110 {offsets = [0, 32], sizes = [2, 32], strides = [1, 1]} : vector<2x128xf32> to vector<2x32xf32>
    %118 = arith.negf %117 : vector<2x32xf32>
    %119 = math.exp %118 : vector<2x32xf32>
    %cst_33 = arith.constant 1.000000e+00 : f32
    %120 = vector.broadcast %cst_33 : f32 to vector<2x32xf32>
    %121 = arith.addf %120, %119 : vector<2x32xf32>
    %122 = arith.divf %120, %121 : vector<2x32xf32>
    %123 = vector.extract_strided_slice %110 {offsets = [0, 64], sizes = [2, 32], strides = [1, 1]} : vector<2x128xf32> to vector<2x32xf32>
    %124 = math.tanh %123 : vector<2x32xf32>
    %125 = vector.extract_strided_slice %110 {offsets = [0, 96], sizes = [2, 32], strides = [1, 1]} : vector<2x128xf32> to vector<2x32xf32>
    %126 = arith.negf %125 : vector<2x32xf32>
    %127 = math.exp %126 : vector<2x32xf32>
    %cst_34 = arith.constant 1.000000e+00 : f32
    %128 = vector.broadcast %cst_34 : f32 to vector<2x32xf32>
    %129 = arith.addf %128, %127 : vector<2x32xf32>
    %130 = arith.divf %128, %129 : vector<2x32xf32>
    %131 = arith.mulf %122, %69 : vector<2x32xf32>
    %132 = arith.mulf %116, %124 : vector<2x32xf32>
    %133 = arith.addf %131, %132 : vector<2x32xf32>
    %134 = math.tanh %133 : vector<2x32xf32>
    %135 = arith.mulf %130, %134 : vector<2x32xf32>
    %136 = arith.index_cast %c1_i32_30 : i32 to index
    %c0_35 = arith.constant 0 : index
    %c0_36 = arith.constant 0 : index
    %137 = vector.load %arg4[%136, %c0_35, %c0_36] : memref<8x2x32xf32, #tpu.memory_space<vmem>>, vector<1x2x32xf32>
    %138 = vector.shape_cast %137 : vector<1x2x32xf32> to vector<2x32xf32>
    %139 = vector.shape_cast %135 : vector<2x32xf32> to vector<1x2x32xf32>
    tpu.vector_store %arg4[%136, %c0_35, %c0_36], %139 {strides = array<i32>} : memref<8x2x32xf32, #tpu.memory_space<vmem>>, vector<1x2x32xf32>,
    %c1_i32_37 = arith.constant 1 : i32
    %140 = arith.addi %c1_i32_30, %c1_i32_37 : i32
    %141 = arith.index_cast %140 : i32 to index
    %c0_38 = arith.constant 0 : index
    %c0_39 = arith.constant 0 : index
    %142 = vector.load %arg1[%141, %c0_38, %c0_39] : memref<8x2x128xf32, #tpu.memory_space<vmem>>, vector<1x2x128xf32>
    %143 = vector.shape_cast %142 : vector<1x2x128xf32> to vector<2x128xf32>
    %144 = arith.addf %143, %108 : vector<2x128xf32>
    %145 = vector.extract_strided_slice %144 {offsets = [0, 0], sizes = [2, 32], strides = [1, 1]} : vector<2x128xf32> to vector<2x32xf32>
    %146 = arith.negf %145 : vector<2x32xf32>
    %147 = math.exp %146 : vector<2x32xf32>
    %cst_40 = arith.constant 1.000000e+00 : f32
    %148 = vector.broadcast %cst_40 : f32 to vector<2x32xf32>
    %149 = arith.addf %148, %147 : vector<2x32xf32>
    %150 = arith.divf %148, %149 : vector<2x32xf32>
    %151 = vector.extract_strided_slice %144 {offsets = [0, 32], sizes = [2, 32], strides = [1, 1]} : vector<2x128xf32> to vector<2x32xf32>
    %152 = arith.negf %151 : vector<2x32xf32>
    %153 = math.exp %152 : vector<2x32xf32>
    %cst_41 = arith.constant 1.000000e+00 : f32
    %154 = vector.broadcast %cst_41 : f32 to vector<2x32xf32>
    %155 = arith.addf %154, %153 : vector<2x32xf32>
    %156 = arith.divf %154, %155 : vector<2x32xf32>
    %157 = vector.extract_strided_slice %144 {offsets = [0, 64], sizes = [2, 32], strides = [1, 1]} : vector<2x128xf32> to vector<2x32xf32>
    %158 = math.tanh %157 : vector<2x32xf32>
    %159 = vector.extract_strided_slice %144 {offsets = [0, 96], sizes = [2, 32], strides = [1, 1]} : vector<2x128xf32> to vector<2x32xf32>
    %160 = arith.negf %159 : vector<2x32xf32>
    %161 = math.exp %160 : vector<2x32xf32>
    %cst_42 = arith.constant 1.000000e+00 : f32
    %162 = vector.broadcast %cst_42 : f32 to vector<2x32xf32>
    %163 = arith.addf %162, %161 : vector<2x32xf32>
    %164 = arith.divf %162, %163 : vector<2x32xf32>
    %165 = arith.mulf %156, %103 : vector<2x32xf32>
    %166 = arith.mulf %150, %158 : vector<2x32xf32>
    %167 = arith.addf %165, %166 : vector<2x32xf32>
    %168 = math.tanh %167 : vector<2x32xf32>
    %169 = arith.mulf %164, %168 : vector<2x32xf32>
    %c2_i32 = arith.constant 2 : i32
    %170 = tpu.concatenate %169, %135 in 1 : vector<2x32xf32>, vector<2x32xf32> -> vector<2x64xf32>
    %cst_43 = arith.constant dense<0.000000e+00> : vector<2x256xf32>
    %171 = tpu.matmul %170, %3, %cst_43 {dimension_numbers = #tpu.dot_dimension_numbers<[1], [0], [0], [1], [0, 0, 1, 1], [], []>} : vector<2x64xf32>, vector<64x256xf32>, vector<2x256xf32> -> vector<2x256xf32>
    %172 = vector.extract_strided_slice %171 {offsets = [0, 0], sizes = [2, 128], strides = [1, 1]} : vector<2x256xf32> to vector<2x128xf32>
    %173 = vector.extract_strided_slice %171 {offsets = [0, 128], sizes = [2, 128], strides = [1, 1]} : vector<2x256xf32> to vector<2x128xf32>
    %174 = arith.addf %173, %8 : vector<2x128xf32>
    %175 = vector.extract_strided_slice %174 {offsets = [0, 0], sizes = [2, 32], strides = [1, 1]} : vector<2x128xf32> to vector<2x32xf32>
    %176 = arith.negf %175 : vector<2x32xf32>
    %177 = math.exp %176 : vector<2x32xf32>
    %cst_44 = arith.constant 1.000000e+00 : f32
    %178 = vector.broadcast %cst_44 : f32 to vector<2x32xf32>
    %179 = arith.addf %178, %177 : vector<2x32xf32>
    %180 = arith.divf %178, %179 : vector<2x32xf32>
    %181 = vector.extract_strided_slice %174 {offsets = [0, 32], sizes = [2, 32], strides = [1, 1]} : vector<2x128xf32> to vector<2x32xf32>
    %182 = arith.negf %181 : vector<2x32xf32>
    %183 = math.exp %182 : vector<2x32xf32>
    %cst_45 = arith.constant 1.000000e+00 : f32
    %184 = vector.broadcast %cst_45 : f32 to vector<2x32xf32>
    %185 = arith.addf %184, %183 : vector<2x32xf32>
    %186 = arith.divf %184, %185 : vector<2x32xf32>
    %187 = vector.extract_strided_slice %174 {offsets = [0, 64], sizes = [2, 32], strides = [1, 1]} : vector<2x128xf32> to vector<2x32xf32>
    %188 = math.tanh %187 : vector<2x32xf32>
    %189 = vector.extract_strided_slice %174 {offsets = [0, 96], sizes = [2, 32], strides = [1, 1]} : vector<2x128xf32> to vector<2x32xf32>
    %190 = arith.negf %189 : vector<2x32xf32>
    %191 = math.exp %190 : vector<2x32xf32>
    %cst_46 = arith.constant 1.000000e+00 : f32
    %192 = vector.broadcast %cst_46 : f32 to vector<2x32xf32>
    %193 = arith.addf %192, %191 : vector<2x32xf32>
    %194 = arith.divf %192, %193 : vector<2x32xf32>
    %195 = arith.mulf %186, %133 : vector<2x32xf32>
    %196 = arith.mulf %180, %188 : vector<2x32xf32>
    %197 = arith.addf %195, %196 : vector<2x32xf32>
    %198 = math.tanh %197 : vector<2x32xf32>
    %199 = arith.mulf %194, %198 : vector<2x32xf32>
    %200 = arith.index_cast %c2_i32 : i32 to index
    %c0_47 = arith.constant 0 : index
    %c0_48 = arith.constant 0 : index
    %201 = vector.load %arg4[%200, %c0_47, %c0_48] : memref<8x2x32xf32, #tpu.memory_space<vmem>>, vector<1x2x32xf32>
    %202 = vector.shape_cast %201 : vector<1x2x32xf32> to vector<2x32xf32>
    %203 = vector.shape_cast %199 : vector<2x32xf32> to vector<1x2x32xf32>
    tpu.vector_store %arg4[%200, %c0_47, %c0_48], %203 {strides = array<i32>} : memref<8x2x32xf32, #tpu.memory_space<vmem>>, vector<1x2x32xf32>,
    %c1_i32_49 = arith.constant 1 : i32
    %204 = arith.addi %c2_i32, %c1_i32_49 : i32
    %205 = arith.index_cast %204 : i32 to index
    %c0_50 = arith.constant 0 : index
    %c0_51 = arith.constant 0 : index
    %206 = vector.load %arg1[%205, %c0_50, %c0_51] : memref<8x2x128xf32, #tpu.memory_space<vmem>>, vector<1x2x128xf32>
    %207 = vector.shape_cast %206 : vector<1x2x128xf32> to vector<2x128xf32>
    %208 = arith.addf %207, %172 : vector<2x128xf32>
    %209 = vector.extract_strided_slice %208 {offsets = [0, 0], sizes = [2, 32], strides = [1, 1]} : vector<2x128xf32> to vector<2x32xf32>
    %210 = arith.negf %209 : vector<2x32xf32>
    %211 = math.exp %210 : vector<2x32xf32>
    %cst_52 = arith.constant 1.000000e+00 : f32
    %212 = vector.broadcast %cst_52 : f32 to vector<2x32xf32>
    %213 = arith.addf %212, %211 : vector<2x32xf32>
    %214 = arith.divf %212, %213 : vector<2x32xf32>
    %215 = vector.extract_strided_slice %208 {offsets = [0, 32], sizes = [2, 32], strides = [1, 1]} : vector<2x128xf32> to vector<2x32xf32>
    %216 = arith.negf %215 : vector<2x32xf32>
    %217 = math.exp %216 : vector<2x32xf32>
    %cst_53 = arith.constant 1.000000e+00 : f32
    %218 = vector.broadcast %cst_53 : f32 to vector<2x32xf32>
    %219 = arith.addf %218, %217 : vector<2x32xf32>
    %220 = arith.divf %218, %219 : vector<2x32xf32>
    %221 = vector.extract_strided_slice %208 {offsets = [0, 64], sizes = [2, 32], strides = [1, 1]} : vector<2x128xf32> to vector<2x32xf32>
    %222 = math.tanh %221 : vector<2x32xf32>
    %223 = vector.extract_strided_slice %208 {offsets = [0, 96], sizes = [2, 32], strides = [1, 1]} : vector<2x128xf32> to vector<2x32xf32>
    %224 = arith.negf %223 : vector<2x32xf32>
    %225 = math.exp %224 : vector<2x32xf32>
    %cst_54 = arith.constant 1.000000e+00 : f32
    %226 = vector.broadcast %cst_54 : f32 to vector<2x32xf32>
    %227 = arith.addf %226, %225 : vector<2x32xf32>
    %228 = arith.divf %226, %227 : vector<2x32xf32>
    %229 = arith.mulf %220, %167 : vector<2x32xf32>
    %230 = arith.mulf %214, %222 : vector<2x32xf32>
    %231 = arith.addf %229, %230 : vector<2x32xf32>
    %232 = math.tanh %231 : vector<2x32xf32>
    %233 = arith.mulf %228, %232 : vector<2x32xf32>
    %c3_i32 = arith.constant 3 : i32
    %234 = tpu.concatenate %233, %199 in 1 : vector<2x32xf32>, vector<2x32xf32> -> vector<2x64xf32>
    %cst_55 = arith.constant dense<0.000000e+00> : vector<2x256xf32>
    %235 = tpu.matmul %234, %3, %cst_55 {dimension_numbers = #tpu.dot_dimension_numbers<[1], [0], [0], [1], [0, 0, 1, 1], [], []>} : vector<2x64xf32>, vector<64x256xf32>, vector<2x256xf32> -> vector<2x256xf32>
    %236 = vector.extract_strided_slice %235 {offsets = [0, 0], sizes = [2, 128], strides = [1, 1]} : vector<2x256xf32> to vector<2x128xf32>
    %237 = vector.extract_strided_slice %235 {offsets = [0, 128], sizes = [2, 128], strides = [1, 1]} : vector<2x256xf32> to vector<2x128xf32>
    %238 = arith.addf %237, %8 : vector<2x128xf32>
    %239 = vector.extract_strided_slice %238 {offsets = [0, 0], sizes = [2, 32], strides = [1, 1]} : vector<2x128xf32> to vector<2x32xf32>
    %240 = arith.negf %239 : vector<2x32xf32>
    %241 = math.exp %240 : vector<2x32xf32>
    %cst_56 = arith.constant 1.000000e+00 : f32
    %242 = vector.broadcast %cst_56 : f32 to vector<2x32xf32>
    %243 = arith.addf %242, %241 : vector<2x32xf32>
    %244 = arith.divf %242, %243 : vector<2x32xf32>
    %245 = vector.extract_strided_slice %238 {offsets = [0, 32], sizes = [2, 32], strides = [1, 1]} : vector<2x128xf32> to vector<2x32xf32>
    %246 = arith.negf %245 : vector<2x32xf32>
    %247 = math.exp %246 : vector<2x32xf32>
    %cst_57 = arith.constant 1.000000e+00 : f32
    %248 = vector.broadcast %cst_57 : f32 to vector<2x32xf32>
    %249 = arith.addf %248, %247 : vector<2x32xf32>
    %250 = arith.divf %248, %249 : vector<2x32xf32>
    %251 = vector.extract_strided_slice %238 {offsets = [0, 64], sizes = [2, 32], strides = [1, 1]} : vector<2x128xf32> to vector<2x32xf32>
    %252 = math.tanh %251 : vector<2x32xf32>
    %253 = vector.extract_strided_slice %238 {offsets = [0, 96], sizes = [2, 32], strides = [1, 1]} : vector<2x128xf32> to vector<2x32xf32>
    %254 = arith.negf %253 : vector<2x32xf32>
    %255 = math.exp %254 : vector<2x32xf32>
    %cst_58 = arith.constant 1.000000e+00 : f32
    %256 = vector.broadcast %cst_58 : f32 to vector<2x32xf32>
    %257 = arith.addf %256, %255 : vector<2x32xf32>
    %258 = arith.divf %256, %257 : vector<2x32xf32>
    %259 = arith.mulf %250, %197 : vector<2x32xf32>
    %260 = arith.mulf %244, %252 : vector<2x32xf32>
    %261 = arith.addf %259, %260 : vector<2x32xf32>
    %262 = math.tanh %261 : vector<2x32xf32>
    %263 = arith.mulf %258, %262 : vector<2x32xf32>
    %264 = arith.index_cast %c3_i32 : i32 to index
    %c0_59 = arith.constant 0 : index
    %c0_60 = arith.constant 0 : index
    %265 = vector.load %arg4[%264, %c0_59, %c0_60] : memref<8x2x32xf32, #tpu.memory_space<vmem>>, vector<1x2x32xf32>
    %266 = vector.shape_cast %265 : vector<1x2x32xf32> to vector<2x32xf32>
    %267 = vector.shape_cast %263 : vector<2x32xf32> to vector<1x2x32xf32>
    tpu.vector_store %arg4[%264, %c0_59, %c0_60], %267 {strides = array<i32>} : memref<8x2x32xf32, #tpu.memory_space<vmem>>, vector<1x2x32xf32>,
    %c1_i32_61 = arith.constant 1 : i32
    %268 = arith.addi %c3_i32, %c1_i32_61 : i32
    %269 = arith.index_cast %268 : i32 to index
    %c0_62 = arith.constant 0 : index
    %c0_63 = arith.constant 0 : index
    %270 = vector.load %arg1[%269, %c0_62, %c0_63] : memref<8x2x128xf32, #tpu.memory_space<vmem>>, vector<1x2x128xf32>
    %271 = vector.shape_cast %270 : vector<1x2x128xf32> to vector<2x128xf32>
    %272 = arith.addf %271, %236 : vector<2x128xf32>
    %273 = vector.extract_strided_slice %272 {offsets = [0, 0], sizes = [2, 32], strides = [1, 1]} : vector<2x128xf32> to vector<2x32xf32>
    %274 = arith.negf %273 : vector<2x32xf32>
    %275 = math.exp %274 : vector<2x32xf32>
    %cst_64 = arith.constant 1.000000e+00 : f32
    %276 = vector.broadcast %cst_64 : f32 to vector<2x32xf32>
    %277 = arith.addf %276, %275 : vector<2x32xf32>
    %278 = arith.divf %276, %277 : vector<2x32xf32>
    %279 = vector.extract_strided_slice %272 {offsets = [0, 32], sizes = [2, 32], strides = [1, 1]} : vector<2x128xf32> to vector<2x32xf32>
    %280 = arith.negf %279 : vector<2x32xf32>
    %281 = math.exp %280 : vector<2x32xf32>
    %cst_65 = arith.constant 1.000000e+00 : f32
    %282 = vector.broadcast %cst_65 : f32 to vector<2x32xf32>
    %283 = arith.addf %282, %281 : vector<2x32xf32>
    %284 = arith.divf %282, %283 : vector<2x32xf32>
    %285 = vector.extract_strided_slice %272 {offsets = [0, 64], sizes = [2, 32], strides = [1, 1]} : vector<2x128xf32> to vector<2x32xf32>
    %286 = math.tanh %285 : vector<2x32xf32>
    %287 = vector.extract_strided_slice %272 {offsets = [0, 96], sizes = [2, 32], strides = [1, 1]} : vector<2x128xf32> to vector<2x32xf32>
    %288 = arith.negf %287 : vector<2x32xf32>
    %289 = math.exp %288 : vector<2x32xf32>
    %cst_66 = arith.constant 1.000000e+00 : f32
    %290 = vector.broadcast %cst_66 : f32 to vector<2x32xf32>
    %291 = arith.addf %290, %289 : vector<2x32xf32>
    %292 = arith.divf %290, %291 : vector<2x32xf32>
    %293 = arith.mulf %284, %231 : vector<2x32xf32>
    %294 = arith.mulf %278, %286 : vector<2x32xf32>
    %295 = arith.addf %293, %294 : vector<2x32xf32>
    %296 = math.tanh %295 : vector<2x32xf32>
    %297 = arith.mulf %292, %296 : vector<2x32xf32>
    %c4_i32 = arith.constant 4 : i32
    %298 = tpu.concatenate %297, %263 in 1 : vector<2x32xf32>, vector<2x32xf32> -> vector<2x64xf32>
    %cst_67 = arith.constant dense<0.000000e+00> : vector<2x256xf32>
    %299 = tpu.matmul %298, %3, %cst_67 {dimension_numbers = #tpu.dot_dimension_numbers<[1], [0], [0], [1], [0, 0, 1, 1], [], []>} : vector<2x64xf32>, vector<64x256xf32>, vector<2x256xf32> -> vector<2x256xf32>
    %300 = vector.extract_strided_slice %299 {offsets = [0, 0], sizes = [2, 128], strides = [1, 1]} : vector<2x256xf32> to vector<2x128xf32>
    %301 = vector.extract_strided_slice %299 {offsets = [0, 128], sizes = [2, 128], strides = [1, 1]} : vector<2x256xf32> to vector<2x128xf32>
    %302 = arith.addf %301, %8 : vector<2x128xf32>
    %303 = vector.extract_strided_slice %302 {offsets = [0, 0], sizes = [2, 32], strides = [1, 1]} : vector<2x128xf32> to vector<2x32xf32>
    %304 = arith.negf %303 : vector<2x32xf32>
    %305 = math.exp %304 : vector<2x32xf32>
    %cst_68 = arith.constant 1.000000e+00 : f32
    %306 = vector.broadcast %cst_68 : f32 to vector<2x32xf32>
    %307 = arith.addf %306, %305 : vector<2x32xf32>
    %308 = arith.divf %306, %307 : vector<2x32xf32>
    %309 = vector.extract_strided_slice %302 {offsets = [0, 32], sizes = [2, 32], strides = [1, 1]} : vector<2x128xf32> to vector<2x32xf32>
    %310 = arith.negf %309 : vector<2x32xf32>
    %311 = math.exp %310 : vector<2x32xf32>
    %cst_69 = arith.constant 1.000000e+00 : f32
    %312 = vector.broadcast %cst_69 : f32 to vector<2x32xf32>
    %313 = arith.addf %312, %311 : vector<2x32xf32>
    %314 = arith.divf %312, %313 : vector<2x32xf32>
    %315 = vector.extract_strided_slice %302 {offsets = [0, 64], sizes = [2, 32], strides = [1, 1]} : vector<2x128xf32> to vector<2x32xf32>
    %316 = math.tanh %315 : vector<2x32xf32>
    %317 = vector.extract_strided_slice %302 {offsets = [0, 96], sizes = [2, 32], strides = [1, 1]} : vector<2x128xf32> to vector<2x32xf32>
    %318 = arith.negf %317 : vector<2x32xf32>
    %319 = math.exp %318 : vector<2x32xf32>
    %cst_70 = arith.constant 1.000000e+00 : f32
    %320 = vector.broadcast %cst_70 : f32 to vector<2x32xf32>
    %321 = arith.addf %320, %319 : vector<2x32xf32>
    %322 = arith.divf %320, %321 : vector<2x32xf32>
    %323 = arith.mulf %314, %261 : vector<2x32xf32>
    %324 = arith.mulf %308, %316 : vector<2x32xf32>
    %325 = arith.addf %323, %324 : vector<2x32xf32>
    %326 = math.tanh %325 : vector<2x32xf32>
    %327 = arith.mulf %322, %326 : vector<2x32xf32>
    %328 = arith.index_cast %c4_i32 : i32 to index
    %c0_71 = arith.constant 0 : index
    %c0_72 = arith.constant 0 : index
    %329 = vector.load %arg4[%328, %c0_71, %c0_72] : memref<8x2x32xf32, #tpu.memory_space<vmem>>, vector<1x2x32xf32>
    %330 = vector.shape_cast %329 : vector<1x2x32xf32> to vector<2x32xf32>
    %331 = vector.shape_cast %327 : vector<2x32xf32> to vector<1x2x32xf32>
    tpu.vector_store %arg4[%328, %c0_71, %c0_72], %331 {strides = array<i32>} : memref<8x2x32xf32, #tpu.memory_space<vmem>>, vector<1x2x32xf32>,
    %c1_i32_73 = arith.constant 1 : i32
    %332 = arith.addi %c4_i32, %c1_i32_73 : i32
    %333 = arith.index_cast %332 : i32 to index
    %c0_74 = arith.constant 0 : index
    %c0_75 = arith.constant 0 : index
    %334 = vector.load %arg1[%333, %c0_74, %c0_75] : memref<8x2x128xf32, #tpu.memory_space<vmem>>, vector<1x2x128xf32>
    %335 = vector.shape_cast %334 : vector<1x2x128xf32> to vector<2x128xf32>
    %336 = arith.addf %335, %300 : vector<2x128xf32>
    %337 = vector.extract_strided_slice %336 {offsets = [0, 0], sizes = [2, 32], strides = [1, 1]} : vector<2x128xf32> to vector<2x32xf32>
    %338 = arith.negf %337 : vector<2x32xf32>
    %339 = math.exp %338 : vector<2x32xf32>
    %cst_76 = arith.constant 1.000000e+00 : f32
    %340 = vector.broadcast %cst_76 : f32 to vector<2x32xf32>
    %341 = arith.addf %340, %339 : vector<2x32xf32>
    %342 = arith.divf %340, %341 : vector<2x32xf32>
    %343 = vector.extract_strided_slice %336 {offsets = [0, 32], sizes = [2, 32], strides = [1, 1]} : vector<2x128xf32> to vector<2x32xf32>
    %344 = arith.negf %343 : vector<2x32xf32>
    %345 = math.exp %344 : vector<2x32xf32>
    %cst_77 = arith.constant 1.000000e+00 : f32
    %346 = vector.broadcast %cst_77 : f32 to vector<2x32xf32>
    %347 = arith.addf %346, %345 : vector<2x32xf32>
    %348 = arith.divf %346, %347 : vector<2x32xf32>
    %349 = vector.extract_strided_slice %336 {offsets = [0, 64], sizes = [2, 32], strides = [1, 1]} : vector<2x128xf32> to vector<2x32xf32>
    %350 = math.tanh %349 : vector<2x32xf32>
    %351 = vector.extract_strided_slice %336 {offsets = [0, 96], sizes = [2, 32], strides = [1, 1]} : vector<2x128xf32> to vector<2x32xf32>
    %352 = arith.negf %351 : vector<2x32xf32>
    %353 = math.exp %352 : vector<2x32xf32>
    %cst_78 = arith.constant 1.000000e+00 : f32
    %354 = vector.broadcast %cst_78 : f32 to vector<2x32xf32>
    %355 = arith.addf %354, %353 : vector<2x32xf32>
    %356 = arith.divf %354, %355 : vector<2x32xf32>
    %357 = arith.mulf %348, %295 : vector<2x32xf32>
    %358 = arith.mulf %342, %350 : vector<2x32xf32>
    %359 = arith.addf %357, %358 : vector<2x32xf32>
    %360 = math.tanh %359 : vector<2x32xf32>
    %361 = arith.mulf %356, %360 : vector<2x32xf32>
    %c5_i32 = arith.constant 5 : i32
    %362 = tpu.concatenate %361, %327 in 1 : vector<2x32xf32>, vector<2x32xf32> -> vector<2x64xf32>
    %cst_79 = arith.constant dense<0.000000e+00> : vector<2x256xf32>
    %363 = tpu.matmul %362, %3, %cst_79 {dimension_numbers = #tpu.dot_dimension_numbers<[1], [0], [0], [1], [0, 0, 1, 1], [], []>} : vector<2x64xf32>, vector<64x256xf32>, vector<2x256xf32> -> vector<2x256xf32>
    %364 = vector.extract_strided_slice %363 {offsets = [0, 0], sizes = [2, 128], strides = [1, 1]} : vector<2x256xf32> to vector<2x128xf32>
    %365 = vector.extract_strided_slice %363 {offsets = [0, 128], sizes = [2, 128], strides = [1, 1]} : vector<2x256xf32> to vector<2x128xf32>
    %366 = arith.addf %365, %8 : vector<2x128xf32>
    %367 = vector.extract_strided_slice %366 {offsets = [0, 0], sizes = [2, 32], strides = [1, 1]} : vector<2x128xf32> to vector<2x32xf32>
    %368 = arith.negf %367 : vector<2x32xf32>
    %369 = math.exp %368 : vector<2x32xf32>
    %cst_80 = arith.constant 1.000000e+00 : f32
    %370 = vector.broadcast %cst_80 : f32 to vector<2x32xf32>
    %371 = arith.addf %370, %369 : vector<2x32xf32>
    %372 = arith.divf %370, %371 : vector<2x32xf32>
    %373 = vector.extract_strided_slice %366 {offsets = [0, 32], sizes = [2, 32], strides = [1, 1]} : vector<2x128xf32> to vector<2x32xf32>
    %374 = arith.negf %373 : vector<2x32xf32>
    %375 = math.exp %374 : vector<2x32xf32>
    %cst_81 = arith.constant 1.000000e+00 : f32
    %376 = vector.broadcast %cst_81 : f32 to vector<2x32xf32>
    %377 = arith.addf %376, %375 : vector<2x32xf32>
    %378 = arith.divf %376, %377 : vector<2x32xf32>
    %379 = vector.extract_strided_slice %366 {offsets = [0, 64], sizes = [2, 32], strides = [1, 1]} : vector<2x128xf32> to vector<2x32xf32>
    %380 = math.tanh %379 : vector<2x32xf32>
    %381 = vector.extract_strided_slice %366 {offsets = [0, 96], sizes = [2, 32], strides = [1, 1]} : vector<2x128xf32> to vector<2x32xf32>
    %382 = arith.negf %381 : vector<2x32xf32>
    %383 = math.exp %382 : vector<2x32xf32>
    %cst_82 = arith.constant 1.000000e+00 : f32
    %384 = vector.broadcast %cst_82 : f32 to vector<2x32xf32>
    %385 = arith.addf %384, %383 : vector<2x32xf32>
    %386 = arith.divf %384, %385 : vector<2x32xf32>
    %387 = arith.mulf %378, %325 : vector<2x32xf32>
    %388 = arith.mulf %372, %380 : vector<2x32xf32>
    %389 = arith.addf %387, %388 : vector<2x32xf32>
    %390 = math.tanh %389 : vector<2x32xf32>
    %391 = arith.mulf %386, %390 : vector<2x32xf32>
    %392 = arith.index_cast %c5_i32 : i32 to index
    %c0_83 = arith.constant 0 : index
    %c0_84 = arith.constant 0 : index
    %393 = vector.load %arg4[%392, %c0_83, %c0_84] : memref<8x2x32xf32, #tpu.memory_space<vmem>>, vector<1x2x32xf32>
    %394 = vector.shape_cast %393 : vector<1x2x32xf32> to vector<2x32xf32>
    %395 = vector.shape_cast %391 : vector<2x32xf32> to vector<1x2x32xf32>
    tpu.vector_store %arg4[%392, %c0_83, %c0_84], %395 {strides = array<i32>} : memref<8x2x32xf32, #tpu.memory_space<vmem>>, vector<1x2x32xf32>,
    %c1_i32_85 = arith.constant 1 : i32
    %396 = arith.addi %c5_i32, %c1_i32_85 : i32
    %397 = arith.index_cast %396 : i32 to index
    %c0_86 = arith.constant 0 : index
    %c0_87 = arith.constant 0 : index
    %398 = vector.load %arg1[%397, %c0_86, %c0_87] : memref<8x2x128xf32, #tpu.memory_space<vmem>>, vector<1x2x128xf32>
    %399 = vector.shape_cast %398 : vector<1x2x128xf32> to vector<2x128xf32>
    %400 = arith.addf %399, %364 : vector<2x128xf32>
    %401 = vector.extract_strided_slice %400 {offsets = [0, 0], sizes = [2, 32], strides = [1, 1]} : vector<2x128xf32> to vector<2x32xf32>
    %402 = arith.negf %401 : vector<2x32xf32>
    %403 = math.exp %402 : vector<2x32xf32>
    %cst_88 = arith.constant 1.000000e+00 : f32
    %404 = vector.broadcast %cst_88 : f32 to vector<2x32xf32>
    %405 = arith.addf %404, %403 : vector<2x32xf32>
    %406 = arith.divf %404, %405 : vector<2x32xf32>
    %407 = vector.extract_strided_slice %400 {offsets = [0, 32], sizes = [2, 32], strides = [1, 1]} : vector<2x128xf32> to vector<2x32xf32>
    %408 = arith.negf %407 : vector<2x32xf32>
    %409 = math.exp %408 : vector<2x32xf32>
    %cst_89 = arith.constant 1.000000e+00 : f32
    %410 = vector.broadcast %cst_89 : f32 to vector<2x32xf32>
    %411 = arith.addf %410, %409 : vector<2x32xf32>
    %412 = arith.divf %410, %411 : vector<2x32xf32>
    %413 = vector.extract_strided_slice %400 {offsets = [0, 64], sizes = [2, 32], strides = [1, 1]} : vector<2x128xf32> to vector<2x32xf32>
    %414 = math.tanh %413 : vector<2x32xf32>
    %415 = vector.extract_strided_slice %400 {offsets = [0, 96], sizes = [2, 32], strides = [1, 1]} : vector<2x128xf32> to vector<2x32xf32>
    %416 = arith.negf %415 : vector<2x32xf32>
    %417 = math.exp %416 : vector<2x32xf32>
    %cst_90 = arith.constant 1.000000e+00 : f32
    %418 = vector.broadcast %cst_90 : f32 to vector<2x32xf32>
    %419 = arith.addf %418, %417 : vector<2x32xf32>
    %420 = arith.divf %418, %419 : vector<2x32xf32>
    %421 = arith.mulf %412, %359 : vector<2x32xf32>
    %422 = arith.mulf %406, %414 : vector<2x32xf32>
    %423 = arith.addf %421, %422 : vector<2x32xf32>
    %424 = math.tanh %423 : vector<2x32xf32>
    %425 = arith.mulf %420, %424 : vector<2x32xf32>
    %c6_i32 = arith.constant 6 : i32
    %426 = tpu.concatenate %425, %391 in 1 : vector<2x32xf32>, vector<2x32xf32> -> vector<2x64xf32>
    %cst_91 = arith.constant dense<0.000000e+00> : vector<2x256xf32>
    %427 = tpu.matmul %426, %3, %cst_91 {dimension_numbers = #tpu.dot_dimension_numbers<[1], [0], [0], [1], [0, 0, 1, 1], [], []>} : vector<2x64xf32>, vector<64x256xf32>, vector<2x256xf32> -> vector<2x256xf32>
    %428 = vector.extract_strided_slice %427 {offsets = [0, 0], sizes = [2, 128], strides = [1, 1]} : vector<2x256xf32> to vector<2x128xf32>
    %429 = vector.extract_strided_slice %427 {offsets = [0, 128], sizes = [2, 128], strides = [1, 1]} : vector<2x256xf32> to vector<2x128xf32>
    %430 = arith.addf %429, %8 : vector<2x128xf32>
    %431 = vector.extract_strided_slice %430 {offsets = [0, 0], sizes = [2, 32], strides = [1, 1]} : vector<2x128xf32> to vector<2x32xf32>
    %432 = arith.negf %431 : vector<2x32xf32>
    %433 = math.exp %432 : vector<2x32xf32>
    %cst_92 = arith.constant 1.000000e+00 : f32
    %434 = vector.broadcast %cst_92 : f32 to vector<2x32xf32>
    %435 = arith.addf %434, %433 : vector<2x32xf32>
    %436 = arith.divf %434, %435 : vector<2x32xf32>
    %437 = vector.extract_strided_slice %430 {offsets = [0, 32], sizes = [2, 32], strides = [1, 1]} : vector<2x128xf32> to vector<2x32xf32>
    %438 = arith.negf %437 : vector<2x32xf32>
    %439 = math.exp %438 : vector<2x32xf32>
    %cst_93 = arith.constant 1.000000e+00 : f32
    %440 = vector.broadcast %cst_93 : f32 to vector<2x32xf32>
    %441 = arith.addf %440, %439 : vector<2x32xf32>
    %442 = arith.divf %440, %441 : vector<2x32xf32>
    %443 = vector.extract_strided_slice %430 {offsets = [0, 64], sizes = [2, 32], strides = [1, 1]} : vector<2x128xf32> to vector<2x32xf32>
    %444 = math.tanh %443 : vector<2x32xf32>
    %445 = vector.extract_strided_slice %430 {offsets = [0, 96], sizes = [2, 32], strides = [1, 1]} : vector<2x128xf32> to vector<2x32xf32>
    %446 = arith.negf %445 : vector<2x32xf32>
    %447 = math.exp %446 : vector<2x32xf32>
    %cst_94 = arith.constant 1.000000e+00 : f32
    %448 = vector.broadcast %cst_94 : f32 to vector<2x32xf32>
    %449 = arith.addf %448, %447 : vector<2x32xf32>
    %450 = arith.divf %448, %449 : vector<2x32xf32>
    %451 = arith.mulf %442, %389 : vector<2x32xf32>
    %452 = arith.mulf %436, %444 : vector<2x32xf32>
    %453 = arith.addf %451, %452 : vector<2x32xf32>
    %454 = math.tanh %453 : vector<2x32xf32>
    %455 = arith.mulf %450, %454 : vector<2x32xf32>
    %456 = arith.index_cast %c6_i32 : i32 to index
    %c0_95 = arith.constant 0 : index
    %c0_96 = arith.constant 0 : index
    %457 = vector.load %arg4[%456, %c0_95, %c0_96] : memref<8x2x32xf32, #tpu.memory_space<vmem>>, vector<1x2x32xf32>
    %458 = vector.shape_cast %457 : vector<1x2x32xf32> to vector<2x32xf32>
    %459 = vector.shape_cast %455 : vector<2x32xf32> to vector<1x2x32xf32>
    tpu.vector_store %arg4[%456, %c0_95, %c0_96], %459 {strides = array<i32>} : memref<8x2x32xf32, #tpu.memory_space<vmem>>, vector<1x2x32xf32>,
    %c1_i32_97 = arith.constant 1 : i32
    %460 = arith.addi %c6_i32, %c1_i32_97 : i32
    %461 = arith.index_cast %460 : i32 to index
    %c0_98 = arith.constant 0 : index
    %c0_99 = arith.constant 0 : index
    %462 = vector.load %arg1[%461, %c0_98, %c0_99] : memref<8x2x128xf32, #tpu.memory_space<vmem>>, vector<1x2x128xf32>
    %463 = vector.shape_cast %462 : vector<1x2x128xf32> to vector<2x128xf32>
    %464 = arith.addf %463, %428 : vector<2x128xf32>
    %465 = vector.extract_strided_slice %464 {offsets = [0, 0], sizes = [2, 32], strides = [1, 1]} : vector<2x128xf32> to vector<2x32xf32>
    %466 = arith.negf %465 : vector<2x32xf32>
    %467 = math.exp %466 : vector<2x32xf32>
    %cst_100 = arith.constant 1.000000e+00 : f32
    %468 = vector.broadcast %cst_100 : f32 to vector<2x32xf32>
    %469 = arith.addf %468, %467 : vector<2x32xf32>
    %470 = arith.divf %468, %469 : vector<2x32xf32>
    %471 = vector.extract_strided_slice %464 {offsets = [0, 32], sizes = [2, 32], strides = [1, 1]} : vector<2x128xf32> to vector<2x32xf32>
    %472 = arith.negf %471 : vector<2x32xf32>
    %473 = math.exp %472 : vector<2x32xf32>
    %cst_101 = arith.constant 1.000000e+00 : f32
    %474 = vector.broadcast %cst_101 : f32 to vector<2x32xf32>
    %475 = arith.addf %474, %473 : vector<2x32xf32>
    %476 = arith.divf %474, %475 : vector<2x32xf32>
    %477 = vector.extract_strided_slice %464 {offsets = [0, 64], sizes = [2, 32], strides = [1, 1]} : vector<2x128xf32> to vector<2x32xf32>
    %478 = math.tanh %477 : vector<2x32xf32>
    %479 = vector.extract_strided_slice %464 {offsets = [0, 96], sizes = [2, 32], strides = [1, 1]} : vector<2x128xf32> to vector<2x32xf32>
    %480 = arith.negf %479 : vector<2x32xf32>
    %481 = math.exp %480 : vector<2x32xf32>
    %cst_102 = arith.constant 1.000000e+00 : f32
    %482 = vector.broadcast %cst_102 : f32 to vector<2x32xf32>
    %483 = arith.addf %482, %481 : vector<2x32xf32>
    %484 = arith.divf %482, %483 : vector<2x32xf32>
    %485 = arith.mulf %476, %423 : vector<2x32xf32>
    %486 = arith.mulf %470, %478 : vector<2x32xf32>
    %487 = arith.addf %485, %486 : vector<2x32xf32>
    %488 = math.tanh %487 : vector<2x32xf32>
    %489 = arith.mulf %484, %488 : vector<2x32xf32>
    %c7_i32 = arith.constant 7 : i32
    %490 = tpu.concatenate %489, %455 in 1 : vector<2x32xf32>, vector<2x32xf32> -> vector<2x64xf32>
    %cst_103 = arith.constant dense<0.000000e+00> : vector<2x128xf32>
    %491 = tpu.matmul %490, %5, %cst_103 {dimension_numbers = #tpu.dot_dimension_numbers<[1], [0], [0], [1], [0, 0, 1, 1], [], []>} : vector<2x64xf32>, vector<64x128xf32>, vector<2x128xf32> -> vector<2x128xf32>
    %492 = arith.addf %491, %8 : vector<2x128xf32>
    %493 = vector.extract_strided_slice %492 {offsets = [0, 0], sizes = [2, 32], strides = [1, 1]} : vector<2x128xf32> to vector<2x32xf32>
    %494 = arith.negf %493 : vector<2x32xf32>
    %495 = math.exp %494 : vector<2x32xf32>
    %cst_104 = arith.constant 1.000000e+00 : f32
    %496 = vector.broadcast %cst_104 : f32 to vector<2x32xf32>
    %497 = arith.addf %496, %495 : vector<2x32xf32>
    %498 = arith.divf %496, %497 : vector<2x32xf32>
    %499 = vector.extract_strided_slice %492 {offsets = [0, 32], sizes = [2, 32], strides = [1, 1]} : vector<2x128xf32> to vector<2x32xf32>
    %500 = arith.negf %499 : vector<2x32xf32>
    %501 = math.exp %500 : vector<2x32xf32>
    %cst_105 = arith.constant 1.000000e+00 : f32
    %502 = vector.broadcast %cst_105 : f32 to vector<2x32xf32>
    %503 = arith.addf %502, %501 : vector<2x32xf32>
    %504 = arith.divf %502, %503 : vector<2x32xf32>
    %505 = vector.extract_strided_slice %492 {offsets = [0, 64], sizes = [2, 32], strides = [1, 1]} : vector<2x128xf32> to vector<2x32xf32>
    %506 = math.tanh %505 : vector<2x32xf32>
    %507 = vector.extract_strided_slice %492 {offsets = [0, 96], sizes = [2, 32], strides = [1, 1]} : vector<2x128xf32> to vector<2x32xf32>
    %508 = arith.negf %507 : vector<2x32xf32>
    %509 = math.exp %508 : vector<2x32xf32>
    %cst_106 = arith.constant 1.000000e+00 : f32
    %510 = vector.broadcast %cst_106 : f32 to vector<2x32xf32>
    %511 = arith.addf %510, %509 : vector<2x32xf32>
    %512 = arith.divf %510, %511 : vector<2x32xf32>
    %513 = arith.mulf %504, %453 : vector<2x32xf32>
    %514 = arith.mulf %498, %506 : vector<2x32xf32>
    %515 = arith.addf %513, %514 : vector<2x32xf32>
    %516 = math.tanh %515 : vector<2x32xf32>
    %517 = arith.mulf %512, %516 : vector<2x32xf32>
    %c7 = arith.constant 7 : index
    %c0_107 = arith.constant 0 : index
    %c0_108 = arith.constant 0 : index
    %518 = vector.load %arg4[%c7, %c0_107, %c0_108] : memref<8x2x32xf32, #tpu.memory_space<vmem>>, vector<1x2x32xf32>
    %519 = vector.shape_cast %518 : vector<1x2x32xf32> to vector<2x32xf32>
    %520 = vector.shape_cast %517 : vector<2x32xf32> to vector<1x2x32xf32>
    tpu.vector_store %arg4[%c7, %c0_107, %c0_108], %520 {strides = array<i32>} : memref<8x2x32xf32, #tpu.memory_space<vmem>>, vector<1x2x32xf32>,
    %c0_109 = arith.constant 0 : index
    %c0_110 = arith.constant 0 : index
    %521 = vector.load %arg5[%c0_109, %c0_110] : memref<2x32xf32, #tpu.memory_space<vmem>>, vector<2x32xf32>
    tpu.vector_store %arg5[%c0_109, %c0_110], %489 {strides = array<i32>} : memref<2x32xf32, #tpu.memory_space<vmem>>, vector<2x32xf32>,
    %c0_111 = arith.constant 0 : index
    %c0_112 = arith.constant 0 : index
    %522 = vector.load %arg6[%c0_111, %c0_112] : memref<2x32xf32, #tpu.memory_space<vmem>>, vector<2x32xf32>
    tpu.vector_store %arg6[%c0_111, %c0_112], %487 {strides = array<i32>} : memref<2x32xf32, #tpu.memory_space<vmem>>, vector<2x32xf32>,
    %c0_113 = arith.constant 0 : index
    %c0_114 = arith.constant 0 : index
    %523 = vector.load %arg7[%c0_113, %c0_114] : memref<2x32xf32, #tpu.memory_space<vmem>>, vector<2x32xf32>
    tpu.vector_store %arg7[%c0_113, %c0_114], %517 {strides = array<i32>} : memref<2x32xf32, #tpu.memory_space<vmem>>, vector<2x32xf32>,
    %c0_115 = arith.constant 0 : index
    %c0_116 = arith.constant 0 : index
    %524 = vector.load %arg8[%c0_115, %c0_116] : memref<2x32xf32, #tpu.memory_space<vmem>>, vector<2x32xf32>
    tpu.vector_store %arg8[%c0_115, %c0_116], %515 {strides = array<i32>} : memref<2x32xf32, #tpu.memory_space<vmem>>, vector<2x32xf32>,
    return
  }
  func.func @transform_0(%arg0: i32) -> (i32, i32, i32) {
    %c0_i32 = arith.constant 0 : i32
    %c0_i32_0 = arith.constant 0 : i32
    %c0_i32_1 = arith.constant 0 : i32
    return %arg0, %c0_i32, %c0_i32_0 : i32, i32, i32
  }
  func.func @transform_1(%arg0: i32) -> (i32, i32) {
    %c0_i32 = arith.constant 0 : i32
    %c0_i32_0 = arith.constant 0 : i32
    %c0_i32_1 = arith.constant 0 : i32
    return %c0_i32, %c0_i32_0 : i32, i32
  }
  func.func @transform_2(%arg0: i32) -> (i32, i32) {
    %c0_i32 = arith.constant 0 : i32
    %c0_i32_0 = arith.constant 0 : i32
    %c0_i32_1 = arith.constant 0 : i32
    return %c0_i32, %c0_i32_0 : i32, i32
  }
  func.func @transform_3(%arg0: i32) -> (i32, i32, i32) {
    %c0_i32 = arith.constant 0 : i32
    %c0_i32_0 = arith.constant 0 : i32
    %c0_i32_1 = arith.constant 0 : i32
    return %arg0, %c0_i32, %c0_i32_0 : i32, i32, i32
  }
}

</mosaic_0001>

<llo_original>
// kernel: tpu_custom_call.1
$region0: #{tpu_custom_call.1}
  #allocation0 [shape = 'u32[]', space=smem, size = 0x4, offset = 0x4, fixed_abs, tag = 'smem constant byte address 0x4 - core index']
  #allocation1 [shape = 'u32[144,128]{1,0:T(1,128)}', space=vmem, size = 0x12000, scoped, tag = 'internal scratch']
  #allocation2 [shape = 'f32[2,32]{1,0:T(2,128)}', space=vmem, size = 0x400, scoped, tag = 'scratch operand']
  #allocation3 [shape = 'f32[2,32]{1,0:T(2,128)}', space=vmem, size = 0x400, scoped, tag = 'scratch operand']
  #allocation4 [shape = 'f32[2,32]{1,0:T(2,128)}', space=vmem, size = 0x400, scoped, tag = 'scratch operand']
  #allocation5 [shape = 'f32[2,32]{1,0:T(2,128)}', space=vmem, size = 0x400, scoped, tag = 'scratch operand']
  %s0 = inlined_call_operand.hbm [shape: f32[8,2,128], index: 0, kind: input, shape index: {}]
  %s1 = inlined_call_operand.hbm [shape: f32[64,256], index: 1, kind: input, shape index: {}]
  %s2 = inlined_call_operand.vmem [shape: f32[1,128], index: 2, kind: input, shape index: {}]
  %s3 = inlined_call_operand.hbm [shape: f32[8,2,32], index: 3, kind: output, shape index: {}]
  %s4 = sld [smem:[#allocation0]]
  $region34: #{tpu_custom_call.1} parent=0
    _
  %s6 = ssub.s32 1, %s4
  %s7 = scalar_select 0, %s6, %s4
  $region1: #{tpu_custom_call.1} parent=0
    #allocation6 [shape = 'u8[8192]{0}', space=vmem, size = 0x2000, scoped, tag = 'input window, operand 0, single buffered']
    #allocation7 [shape = 's32[1]{0}', space=sflag, size = 0x4, scoped, tag = 'scoped memory for tpu_custom_call.1']
    #allocation8 [shape = 's32[1]{0}', space=sflag, size = 0x4, scoped, tag = 'scoped memory for tpu_custom_call.1']
    #allocation9 [shape = 'u8[65536]{0}', space=vmem, size = 0x10000, scoped, tag = 'input window, operand 1, single buffered']
    #allocation10 [shape = 's32[1]{0}', space=sflag, size = 0x4, scoped, tag = 'scoped memory for tpu_custom_call.1']
    #allocation11 [shape = 'u8[8192]{0}', space=vmem, size = 0x2000, scoped, tag = 'output window, operand 0, single buffered']
    %8 = vsyncpa [#allocation7], 0
    %9 = vsyncpa [#allocation10], 0
    %10 = vsyncpa [#allocation8], 0
    // Predicated region
    $region2: #{tpu_custom_call.1} parent=1 // pred_check
      _
    $region3: #{tpu_custom_call.1} parent=1 // pred_check_branch
      %12 = sbr.rel (0) target = $region5
    $region4: #{tpu_custom_call.1} parent=1 // pred_region
      %s14 = ssub.s32 256, 256
      %15 = vsyncadd [#allocation7], %s14
      %s16 = sshll.u32 [#allocation6], 4
      %s17 = int_to_ptr.vmem [resolvable:$true] %s16
      %22 = dma.hbm_to_vmem [thread:$0]  %s0, 256, %s17, [#allocation7], 32, 32, 2
    $region5: #{tpu_custom_call.1} parent=1 // pred_fallthru
      _
    // Predicated region
    $region6: #{tpu_custom_call.1} parent=1 // pred_check
      _
    $region7: #{tpu_custom_call.1} parent=1 // pred_check_branch
      %24 = sbr.rel (0) target = $region9
    $region8: #{tpu_custom_call.1} parent=1 // pred_region
      %s26 = ssub.s32 2048, 2048
      %27 = vsyncadd [#allocation10], %s26
      %s28 = sshll.u32 [#allocation9], 4
      %s29 = int_to_ptr.vmem [resolvable:$true] %s28
      %34 = dma.hbm_to_vmem [thread:$0]  %s1, 2048, %s29, [#allocation10], 256, 256, 16
    $region9: #{tpu_custom_call.1} parent=1 // pred_fallthru
      _
    // Predicated region
    $region10: #{tpu_custom_call.1} parent=1 // pred_check
      _
    $region11: #{tpu_custom_call.1} parent=1 // pred_check_branch
      %36 = sbr.rel (0) target = $region13
    $region12: #{tpu_custom_call.1} parent=1 // pred_region
      _
    $region13: #{tpu_custom_call.1} parent=1 // pred_fallthru
      _
    // Predicated region
    $region14: #{tpu_custom_call.1} parent=1 // pred_check
      _
    $region15: #{tpu_custom_call.1} parent=1 // pred_check_branch
      %38 = sbr.rel (0) target = $region17
    $region16: #{tpu_custom_call.1} parent=1 // pred_region
      %39 = dma.done [#allocation7], 256
    $region17: #{tpu_custom_call.1} parent=1 // pred_fallthru
      _
    // Predicated region
    $region18: #{tpu_custom_call.1} parent=1 // pred_check
      _
    $region19: #{tpu_custom_call.1} parent=1 // pred_check_branch
      %41 = sbr.rel (0) target = $region21
    $region20: #{tpu_custom_call.1} parent=1 // pred_region
      %42 = dma.done [#allocation10], 2048
    $region21: #{tpu_custom_call.1} parent=1 // pred_fallthru
      _
    %p43 = scmp.eq.s32.totalorder 0, 0
    // Predicated region
    $region22: #{tpu_custom_call.1} parent=1 // pred_check
      %p44 = pneg %p43
    $region23: #{tpu_custom_call.1} parent=1 // pred_check_branch
      %46 = sbr.rel (%p44) target = $region25
    $region24: #{tpu_custom_call.1} parent=1 // pred_region
      %vm47 = vcmask 254976
      %48 = vst.msk [vmem:[#allocation2] sm:$0x3] %vm47, 0.0
      %49 = vst.msk [vmem:[#allocation3] sm:$0x3] %vm47, 0.0
      %50 = vst.msk [vmem:[#allocation4] sm:$0x3] %vm47, 0.0
      %51 = vst.msk [vmem:[#allocation5] sm:$0x3] %vm47, 0.0
    $region25: #{tpu_custom_call.1} parent=1 // pred_fallthru
      _
    %v52 = vld [vmem:[#allocation9] sm:$0xff]
    %v53 = vld [vmem:[#allocation9 + $0x8] sm:$0xff]
    %v54 = vld [vmem:[#allocation9 + $0x10] sm:$0xff]
    %v55 = vld [vmem:[#allocation9 + $0x18] sm:$0xff]
    %v56 = vld [vmem:[#allocation9 + $0x20] sm:$0xff]
    %v57 = vld [vmem:[#allocation9 + $0x28] sm:$0xff]
    %v58 = vld [vmem:[#allocation9 + $0x30] sm:$0xff]
    %v59 = vld [vmem:[#allocation9 + $0x38] sm:$0xff]
    %v60 = vld [vmem:[#allocation9 + $0x40] sm:$0xff]
    %v61 = vld [vmem:[#allocation9 + $0x48] sm:$0xff]
    %v62 = vld [vmem:[#allocation9 + $0x50] sm:$0xff]
    %v63 = vld [vmem:[#allocation9 + $0x58] sm:$0xff]
    %v64 = vld [vmem:[#allocation9 + $0x60] sm:$0xff]
    %v65 = vld [vmem:[#allocation9 + $0x68] sm:$0xff]
    %v66 = vld [vmem:[#allocation9 + $0x70] sm:$0xff]
    %v67 = vld [vmem:[#allocation9 + $0x78] sm:$0xff]
    %v68 = vld [vmem:[%s2] sm:$0x1]
    %v70 = vlaneseq
    %v71 = vshrl.u32 %v70, 7
    %v72 = vsub.s32 0, %v71
    %v73 = vrot.slane %v68, %v72
    %v75 = vld [vmem:[#allocation2] sm:$0x3]
    %v76 = vld [vmem:[#allocation3] sm:$0x3]
    %v77 = vld [vmem:[#allocation4] sm:$0x3]
    %v78 = vld [vmem:[#allocation5] sm:$0x3]
    %vm79 = vcmask 261120
    %v81 = vsel %vm79, %v75, 0
    %83 = vmatprep.subr.mxu0 0.0
    %84 = vmatpush1.msra.mxu0 %v52
    %85 = vmatprep.subr.mxu0 0.0
    %86 = vmatpush1.msra.mxu0 %v54
    %87 = vmatprep.subr.mxu0 0.0
    %88 = vmatpush1.msra.mxu0 %v56
    %89 = vmatprep.subr.mxu0 0.0
    %90 = vmatpush1.msra.mxu0 %v58
    %91 = vmatprep.subr.mxu0 0.0
    %92 = vmatpush1.msra.mxu0 0.0
    %93 = vmatprep.subr.mxu0 0.0
    %94 = vmatpush1.msra.mxu0 0.0
    %95 = vmatprep.subr.mxu0 0.0
    %96 = vmatpush1.msra.mxu0 0.0
    %97 = vmatprep.subr.mxu0 0.0
    %98 = vmatpush1.msra.mxu0 0.0
    %99 = vmatprep.subr.mxu0 0.0
    %100 = vmatpush1.msra.mxu0 0.0
    %101 = vmatprep.subr.mxu0 0.0
    %102 = vmatpush1.msra.mxu0 0.0
    %103 = vmatprep.subr.mxu0 0.0
    %104 = vmatpush1.msra.mxu0 0.0
    %105 = vmatprep.subr.mxu0 0.0
    %106 = vmatpush1.msra.mxu0 0.0
    %107 = vmatprep.subr.mxu0 0.0
    %108 = vmatpush1.msra.mxu0 0.0
    %109 = vmatprep.subr.mxu0 0.0
    %110 = vmatpush1.msra.mxu0 0.0
    %111 = vmatprep.subr.mxu0 0.0
    %112 = vmatpush1.msra.mxu0 0.0
    %113 = vmatprep.subr.mxu0 0.0
    %114 = vmatpush1.msra.mxu0 0.0
    %115 = vmatprep.subr.mxu0 0.0
    %116 = vmatpush1.msra.mxu0 0.0
    %117 = vmatprep.subr.mxu0 0.0
    %118 = vmatpush1.msra.mxu0 0.0
    %119 = vmatprep.subr.mxu0 0.0
    %120 = vmatpush1.msra.mxu0 0.0
    %121 = vmatprep.subr.mxu0 0.0
    %122 = vmatpush1.msra.mxu0 0.0
    %123 = vmatprep.subr.mxu0 0.0
    %124 = vmatpush1.msra.mxu0 0.0
    %125 = vmatprep.subr.mxu0 0.0
    %126 = vmatpush1.msra.mxu0 0.0
    %127 = vmatprep.subr.mxu0 0.0
    %128 = vmatpush1.msra.mxu0 0.0
    %129 = vmatprep.subr.mxu0 0.0
    %130 = vmatpush1.msra.mxu0 0.0
    %131 = vmatprep.subr.mxu0 0.0
    %132 = vmatpush1.msra.mxu0 0.0
    %133 = vmatprep.subr.mxu0 0.0
    %134 = vmatpush1.msra.mxu0 0.0
    %135 = vmatprep.subr.mxu0 0.0
    %136 = vmatpush1.msra.mxu0 0.0
    %137 = vmatprep.subr.mxu0 0.0
    %138 = vmatpush1.msra.mxu0 0.0
    %139 = vmatprep.subr.mxu0 0.0
    %140 = vmatpush1.msra.mxu0 0.0
    %141 = vmatprep.subr.mxu0 0.0
    %142 = vmatpush1.msra.mxu0 0.0
    %143 = vmatprep.subr.mxu0 0.0
    %144 = vmatpush1.msra.mxu0 0.0
    %145 = vmatprep.subr.mxu0 0.0
    %146 = vmatpush1.msra.mxu0 0.0
    %147 = vmatprep.mubr.f32.mxu0 0.0
    %148 = vmatmul.mubr.f32.gmra.mrb[0].mxu0 %v81
    %v149 = vpop.f32.mrb[0].mxu0
    %v150 = vadd.f32 0.0, %v149
    %v151 = vpop.f32.mrb[0].mxu0
    %152 = vdwg.mxu0
    %v153 = vld [vmem:[#allocation6] sm:$0x3]
    %v154 = vadd.f32 %v153, %v150
    %v155 = vxor.u32 %v154, 2147483648
    %v156 = vmul.f32 %v155, 1.442695
    %v157 = vpow.pop %v156
    %v158 = vadd.f32 %v157, 1.0
    %v159 = vrcp.pop %v158
    %v160 = vmul.f32 1.0, %v159
    %v161 = vtanh.pop %v154
    %163 = vrot.lane.b32.xlu0 %v76, 32
    %v164 = vpop.permute.xlu0 %163
    %v166 = vmul.f32 %v160, %v164
    %168 = vrot.lane.b32.xlu0 %v161, 64
    %v169 = vpop.permute.xlu0 %168
    %v171 = vmul.f32 %v160, %v169
    %173 = vrot.lane.b32.xlu0 %v171, 32
    %v174 = vpop.permute.xlu0 %173
    %v176 = vadd.f32 %v166, %v174
    %v177 = vtanh.pop %v176
    %179 = vrot.lane.b32.xlu0 %v177, 64
    %v180 = vpop.permute.xlu0 %179
    %v182 = vmul.f32 %v160, %v180
    %184 = vrot.lane.b32.xlu0 %v182, 32
    %v185 = vpop.permute.xlu0 %184
    %188 = vrot.lane.b32.xlu0 %v77, 32
    %v189 = vpop.permute.xlu0 %188
    %v191 = vsel %vm79, %v185, %v189
    %vm192 = vcmask 523264
    %v194 = vsel %vm192, %v191, 0
    %196 = vmatprep.subr.mxu0 %v53
    %197 = vmatpush1.msra.mxu0 %v52
    %198 = vmatprep.subr.mxu0 %v55
    %199 = vmatpush1.msra.mxu0 %v54
    %200 = vmatprep.subr.mxu0 %v57
    %201 = vmatpush1.msra.mxu0 %v56
    %202 = vmatprep.subr.mxu0 %v59
    %203 = vmatpush1.msra.mxu0 %v58
    %204 = vmatprep.subr.mxu0 %v61
    %205 = vmatpush1.msra.mxu0 %v60
    %206 = vmatprep.subr.mxu0 %v63
    %207 = vmatpush1.msra.mxu0 %v62
    %208 = vmatprep.subr.mxu0 %v65
    %209 = vmatpush1.msra.mxu0 %v64
    %210 = vmatprep.subr.mxu0 %v67
    %211 = vmatpush1.msra.mxu0 %v66
    %212 = vmatprep.subr.mxu0 0.0
    %213 = vmatpush1.msra.mxu0 0.0
    %214 = vmatprep.subr.mxu0 0.0
    %215 = vmatpush1.msra.mxu0 0.0
    %216 = vmatprep.subr.mxu0 0.0
    %217 = vmatpush1.msra.mxu0 0.0
    %218 = vmatprep.subr.mxu0 0.0
    %219 = vmatpush1.msra.mxu0 0.0
    %220 = vmatprep.subr.mxu0 0.0
    %221 = vmatpush1.msra.mxu0 0.0
    %222 = vmatprep.subr.mxu0 0.0
    %223 = vmatpush1.msra.mxu0 0.0
    %224 = vmatprep.subr.mxu0 0.0
    %225 = vmatpush1.msra.mxu0 0.0
    %226 = vmatprep.subr.mxu0 0.0
    %227 = vmatpush1.msra.mxu0 0.0
    %228 = vmatprep.subr.mxu0 0.0
    %229 = vmatpush1.msra.mxu0 0.0
    %230 = vmatprep.subr.mxu0 0.0
    %231 = vmatpush1.msra.mxu0 0.0
    %232 = vmatprep.subr.mxu0 0.0
    %233 = vmatpush1.msra.mxu0 0.0
    %234 = vmatprep.subr.mxu0 0.0
    %235 = vmatpush1.msra.mxu0 0.0
    %236 = vmatprep.subr.mxu0 0.0
    %237 = vmatpush1.msra.mxu0 0.0
    %238 = vmatprep.subr.mxu0 0.0
    %239 = vmatpush1.msra.mxu0 0.0
    %240 = vmatprep.subr.mxu0 0.0
    %241 = vmatpush1.msra.mxu0 0.0
    %242 = vmatprep.subr.mxu0 0.0
    %243 = vmatpush1.msra.mxu0 0.0
    %244 = vmatprep.subr.mxu0 0.0
    %245 = vmatpush1.msra.mxu0 0.0
    %246 = vmatprep.subr.mxu0 0.0
    %247 = vmatpush1.msra.mxu0 0.0
    %248 = vmatprep.subr.mxu0 0.0
    %249 = vmatpush1.msra.mxu0 0.0
    %250 = vmatprep.subr.mxu0 0.0
    %251 = vmatpush1.msra.mxu0 0.0
    %252 = vmatprep.subr.mxu0 0.0
    %253 = vmatpush1.msra.mxu0 0.0
    %254 = vmatprep.subr.mxu0 0.0
    %255 = vmatpush1.msra.mxu0 0.0
    %256 = vmatprep.subr.mxu0 0.0
    %257 = vmatpush1.msra.mxu0 0.0
    %258 = vmatprep.subr.mxu0 0.0
    %259 = vmatpush1.msra.mxu0 0.0
    %260 = vmatprep.mubr.f32.mxu0 0.0
    %261 = vmatmul.mubr.f32.gmra.mrb[0].mxu0 %v194
    %v262 = vpop.f32.mrb[0].mxu0
    %v263 = vadd.f32 0.0, %v262
    %v264 = vpop.f32.mrb[0].mxu0
    %v265 = vadd.f32 0.0, %v264
    %266 = vdwg.mxu0
    %v267 = vadd.f32 %v265, %v73
    %v268 = vxor.u32 %v267, 2147483648
    %v269 = vmul.f32 %v268, 1.442695
    %v270 = vpow.pop %v269
    %v271 = vadd.f32 %v270, 1.0
    %v272 = vrcp.pop %v271
    %v273 = vmul.f32 1.0, %v272
    %v274 = vtanh.pop %v267
    %276 = vrot.lane.b32.xlu0 %v78, 32
    %v277 = vpop.permute.xlu0 %276
    %v279 = vmul.f32 %v273, %v277
    %281 = vrot.lane.b32.xlu0 %v274, 64
    %v282 = vpop.permute.xlu0 %281
    %v284 = vmul.f32 %v273, %v282
    %286 = vrot.lane.b32.xlu0 %v284, 32
    %v287 = vpop.permute.xlu0 %286
    %v289 = vadd.f32 %v279, %v287
    %v290 = vtanh.pop %v289
    %292 = vrot.lane.b32.xlu0 %v290, 64
    %v293 = vpop.permute.xlu0 %292
    %v295 = vmul.f32 %v273, %v293
    %297 = vrot.lane.b32.xlu0 %v295, 32
    %v298 = vpop.permute.xlu0 %297
    %vm300 = vcmask 254976
    %301 = vst.msk [vmem:[#allocation11] sm:$0x3] %vm300, %v298
    %s302 = scalar_lea.vmem [#allocation6], 2
    %v303 = vld [vmem:[%s302] sm:$0x3]
    %v304 = vadd.f32 %v303, %v263
    %v305 = vxor.u32 %v304, 2147483648
    %v306 = vmul.f32 %v305, 1.442695
    %v307 = vpow.pop %v306
    %v308 = vadd.f32 %v307, 1.0
    %v309 = vrcp.pop %v308
    %v310 = vmul.f32 1.0, %v309
    %v311 = vtanh.pop %v304
    %v312 = vmul.f32 %v310, %v176
    %314 = vrot.lane.b32.xlu0 %v311, 64
    %v315 = vpop.permute.xlu0 %314
    %v317 = vmul.f32 %v310, %v315
    %319 = vrot.lane.b32.xlu0 %v317, 32
    %v320 = vpop.permute.xlu0 %319
    %v322 = vadd.f32 %v312, %v320
    %v323 = vtanh.pop %v322
    %325 = vrot.lane.b32.xlu0 %v323, 64
    %v326 = vpop.permute.xlu0 %325
    %v328 = vmul.f32 %v310, %v326
    %330 = vrot.lane.b32.xlu0 %v328, 32
    %v331 = vpop.permute.xlu0 %330
    %333 = vrot.lane.b32.xlu0 %v295, 64
    %v334 = vpop.permute.xlu0 %333
    %v336 = vsel %vm79, %v331, %v334
    %v338 = vsel %vm192, %v336, 0
    %340 = vmatprep.subr.mxu0 %v53
    %341 = vmatpush1.msra.mxu0 %v52
    %342 = vmatprep.subr.mxu0 %v55
    %343 = vmatpush1.msra.mxu0 %v54
    %344 = vmatprep.subr.mxu0 %v57
    %345 = vmatpush1.msra.mxu0 %v56
    %346 = vmatprep.subr.mxu0 %v59
    %347 = vmatpush1.msra.mxu0 %v58
    %348 = vmatprep.subr.mxu0 %v61
    %349 = vmatpush1.msra.mxu0 %v60
    %350 = vmatprep.subr.mxu0 %v63
    %351 = vmatpush1.msra.mxu0 %v62
    %352 = vmatprep.subr.mxu0 %v65
    %353 = vmatpush1.msra.mxu0 %v64
    %354 = vmatprep.subr.mxu0 %v67
    %355 = vmatpush1.msra.mxu0 %v66
    %356 = vmatprep.subr.mxu0 0.0
    %357 = vmatpush1.msra.mxu0 0.0
    %358 = vmatprep.subr.mxu0 0.0
    %359 = vmatpush1.msra.mxu0 0.0
    %360 = vmatprep.subr.mxu0 0.0
    %361 = vmatpush1.msra.mxu0 0.0
    %362 = vmatprep.subr.mxu0 0.0
    %363 = vmatpush1.msra.mxu0 0.0
    %364 = vmatprep.subr.mxu0 0.0
    %365 = vmatpush1.msra.mxu0 0.0
    %366 = vmatprep.subr.mxu0 0.0
    %367 = vmatpush1.msra.mxu0 0.0
    %368 = vmatprep.subr.mxu0 0.0
    %369 = vmatpush1.msra.mxu0 0.0
    %370 = vmatprep.subr.mxu0 0.0
    %371 = vmatpush1.msra.mxu0 0.0
    %372 = vmatprep.subr.mxu0 0.0
    %373 = vmatpush1.msra.mxu0 0.0
    %374 = vmatprep.subr.mxu0 0.0
    %375 = vmatpush1.msra.mxu0 0.0
    %376 = vmatprep.subr.mxu0 0.0
    %377 = vmatpush1.msra.mxu0 0.0
    %378 = vmatprep.subr.mxu0 0.0
    %379 = vmatpush1.msra.mxu0 0.0
    %380 = vmatprep.subr.mxu0 0.0
    %381 = vmatpush1.msra.mxu0 0.0
    %382 = vmatprep.subr.mxu0 0.0
    %383 = vmatpush1.msra.mxu0 0.0
    %384 = vmatprep.subr.mxu0 0.0
    %385 = vmatpush1.msra.mxu0 0.0
    %386 = vmatprep.subr.mxu0 0.0
    %387 = vmatpush1.msra.mxu0 0.0
    %388 = vmatprep.subr.mxu0 0.0
    %389 = vmatpush1.msra.mxu0 0.0
    %390 = vmatprep.subr.mxu0 0.0
    %391 = vmatpush1.msra.mxu0 0.0
    %392 = vmatprep.subr.mxu0 0.0
    %393 = vmatpush1.msra.mxu0 0.0
    %394 = vmatprep.subr.mxu0 0.0
    %395 = vmatpush1.msra.mxu0 0.0
    %396 = vmatprep.subr.mxu0 0.0
    %397 = vmatpush1.msra.mxu0 0.0
    %398 = vmatprep.subr.mxu0 0.0
    %399 = vmatpush1.msra.mxu0 0.0
    %400 = vmatprep.subr.mxu0 0.0
    %401 = vmatpush1.msra.mxu0 0.0
    %402 = vmatprep.subr.mxu0 0.0
    %403 = vmatpush1.msra.mxu0 0.0
    %404 = vmatprep.mubr.f32.mxu0 0.0
    %405 = vmatmul.mubr.f32.gmra.mrb[0].mxu0 %v338
    %v406 = vpop.f32.mrb[0].mxu0
    %v407 = vadd.f32 0.0, %v406
    %v408 = vpop.f32.mrb[0].mxu0
    %v409 = vadd.f32 0.0, %v408
    %410 = vdwg.mxu0
    %v411 = vadd.f32 %v409, %v73
    %v412 = vxor.u32 %v411, 2147483648
    %v413 = vmul.f32 %v412, 1.442695
    %v414 = vpow.pop %v413
    %v415 = vadd.f32 %v414, 1.0
    %v416 = vrcp.pop %v415
    %v417 = vmul.f32 1.0, %v416
    %v418 = vtanh.pop %v411
    %v419 = vmul.f32 %v417, %v289
    %421 = vrot.lane.b32.xlu0 %v418, 64
    %v422 = vpop.permute.xlu0 %421
    %v424 = vmul.f32 %v417, %v422
    %426 = vrot.lane.b32.xlu0 %v424, 32
    %v427 = vpop.permute.xlu0 %426
    %v429 = vadd.f32 %v419, %v427
    %v430 = vtanh.pop %v429
    %432 = vrot.lane.b32.xlu0 %v430, 64
    %v433 = vpop.permute.xlu0 %432
    %v435 = vmul.f32 %v417, %v433
    %437 = vrot.lane.b32.xlu0 %v435, 32
    %v438 = vpop.permute.xlu0 %437
    %s440 = scalar_lea.vmem [#allocation11], 2
    %441 = vst.msk [vmem:[%s440] sm:$0x3] %vm300, %v438
    %s442 = scalar_lea.vmem [#allocation6], 4
    %v443 = vld [vmem:[%s442] sm:$0x3]
    %v444 = vadd.f32 %v443, %v407
    %v445 = vxor.u32 %v444, 2147483648
    %v446 = vmul.f32 %v445, 1.442695
    %v447 = vpow.pop %v446
    %v448 = vadd.f32 %v447, 1.0
    %v449 = vrcp.pop %v448
    %v450 = vmul.f32 1.0, %v449
    %v451 = vtanh.pop %v444
    %v452 = vmul.f32 %v450, %v322
    %454 = vrot.lane.b32.xlu0 %v451, 64
    %v455 = vpop.permute.xlu0 %454
    %v457 = vmul.f32 %v450, %v455
    %459 = vrot.lane.b32.xlu0 %v457, 32
    %v460 = vpop.permute.xlu0 %459
    %v462 = vadd.f32 %v452, %v460
    %v463 = vtanh.pop %v462
    %465 = vrot.lane.b32.xlu0 %v463, 64
    %v466 = vpop.permute.xlu0 %465
    %v468 = vmul.f32 %v450, %v466
    %470 = vrot.lane.b32.xlu0 %v468, 32
    %v471 = vpop.permute.xlu0 %470
    %473 = vrot.lane.b32.xlu0 %v435, 64
    %v474 = vpop.permute.xlu0 %473
    %v476 = vsel %vm79, %v471, %v474
    %v478 = vsel %vm192, %v476, 0
    %480 = vmatprep.subr.mxu0 %v53
    %481 = vmatpush1.msra.mxu0 %v52
    %482 = vmatprep.subr.mxu0 %v55
    %483 = vmatpush1.msra.mxu0 %v54
    %484 = vmatprep.subr.mxu0 %v57
    %485 = vmatpush1.msra.mxu0 %v56
    %486 = vmatprep.subr.mxu0 %v59
    %487 = vmatpush1.msra.mxu0 %v58
    %488 = vmatprep.subr.mxu0 %v61
    %489 = vmatpush1.msra.mxu0 %v60
    %490 = vmatprep.subr.mxu0 %v63
    %491 = vmatpush1.msra.mxu0 %v62
    %492 = vmatprep.subr.mxu0 %v65
    %493 = vmatpush1.msra.mxu0 %v64
    %494 = vmatprep.subr.mxu0 %v67
    %495 = vmatpush1.msra.mxu0 %v66
    %496 = vmatprep.subr.mxu0 0.0
    %497 = vmatpush1.msra.mxu0 0.0
    %498 = vmatprep.subr.mxu0 0.0
    %499 = vmatpush1.msra.mxu0 0.0
    %500 = vmatprep.subr.mxu0 0.0
    %501 = vmatpush1.msra.mxu0 0.0
    %502 = vmatprep.subr.mxu0 0.0
    %503 = vmatpush1.msra.mxu0 0.0
    %504 = vmatprep.subr.mxu0 0.0
    %505 = vmatpush1.msra.mxu0 0.0
    %506 = vmatprep.subr.mxu0 0.0
    %507 = vmatpush1.msra.mxu0 0.0
    %508 = vmatprep.subr.mxu0 0.0
    %509 = vmatpush1.msra.mxu0 0.0
    %510 = vmatprep.subr.mxu0 0.0
    %511 = vmatpush1.msra.mxu0 0.0
    %512 = vmatprep.subr.mxu0 0.0
    %513 = vmatpush1.msra.mxu0 0.0
    %514 = vmatprep.subr.mxu0 0.0
    %515 = vmatpush1.msra.mxu0 0.0
    %516 = vmatprep.subr.mxu0 0.0
    %517 = vmatpush1.msra.mxu0 0.0
    %518 = vmatprep.subr.mxu0 0.0
    %519 = vmatpush1.msra.mxu0 0.0
    %520 = vmatprep.subr.mxu0 0.0
    %521 = vmatpush1.msra.mxu0 0.0
    %522 = vmatprep.subr.mxu0 0.0
    %523 = vmatpush1.msra.mxu0 0.0
    %524 = vmatprep.subr.mxu0 0.0
    %525 = vmatpush1.msra.mxu0 0.0
    %526 = vmatprep.subr.mxu0 0.0
    %527 = vmatpush1.msra.mxu0 0.0
    %528 = vmatprep.subr.mxu0 0.0
    %529 = vmatpush1.msra.mxu0 0.0
    %530 = vmatprep.subr.mxu0 0.0
    %531 = vmatpush1.msra.mxu0 0.0
    %532 = vmatprep.subr.mxu0 0.0
    %533 = vmatpush1.msra.mxu0 0.0
    %534 = vmatprep.subr.mxu0 0.0
    %535 = vmatpush1.msra.mxu0 0.0
    %536 = vmatprep.subr.mxu0 0.0
    %537 = vmatpush1.msra.mxu0 0.0
    %538 = vmatprep.subr.mxu0 0.0
    %539 = vmatpush1.msra.mxu0 0.0
    %540 = vmatprep.subr.mxu0 0.0
    %541 = vmatpush1.msra.mxu0 0.0
    %542 = vmatprep.subr.mxu0 0.0
    %543 = vmatpush1.msra.mxu0 0.0
    %544 = vmatprep.mubr.f32.mxu0 0.0
    %545 = vmatmul.mubr.f32.gmra.mrb[0].mxu0 %v478
    %v546 = vpop.f32.mrb[0].mxu0
    %v547 = vadd.f32 0.0, %v546
    %v548 = vpop.f32.mrb[0].mxu0
    %v549 = vadd.f32 0.0, %v548
    %550 = vdwg.mxu0
    %v551 = vadd.f32 %v549, %v73
    %v552 = vxor.u32 %v551, 2147483648
    %v553 = vmul.f32 %v552, 1.442695
    %v554 = vpow.pop %v553
    %v555 = vadd.f32 %v554, 1.0
    %v556 = vrcp.pop %v555
    %v557 = vmul.f32 1.0, %v556
    %v558 = vtanh.pop %v551
    %v559 = vmul.f32 %v557, %v429
    %561 = vrot.lane.b32.xlu0 %v558, 64
    %v562 = vpop.permute.xlu0 %561
    %v564 = vmul.f32 %v557, %v562
    %566 = vrot.lane.b32.xlu0 %v564, 32
    %v567 = vpop.permute.xlu0 %566
    %v569 = vadd.f32 %v559, %v567
    %v570 = vtanh.pop %v569
    %572 = vrot.lane.b32.xlu0 %v570, 64
    %v573 = vpop.permute.xlu0 %572
    %v575 = vmul.f32 %v557, %v573
    %577 = vrot.lane.b32.xlu0 %v575, 32
    %v578 = vpop.permute.xlu0 %577
    %s580 = scalar_lea.vmem [#allocation11], 4
    %581 = vst.msk [vmem:[%s580] sm:$0x3] %vm300, %v578
    %s582 = scalar_lea.vmem [#allocation6], 6
    %v583 = vld [vmem:[%s582] sm:$0x3]
    %v584 = vadd.f32 %v583, %v547
    %v585 = vxor.u32 %v584, 2147483648
    %v586 = vmul.f32 %v585, 1.442695
    %v587 = vpow.pop %v586
    %v588 = vadd.f32 %v587, 1.0
    %v589 = vrcp.pop %v588
    %v590 = vmul.f32 1.0, %v589
    %v591 = vtanh.pop %v584
    %v592 = vmul.f32 %v590, %v462
    %594 = vrot.lane.b32.xlu0 %v591, 64
    %v595 = vpop.permute.xlu0 %594
    %v597 = vmul.f32 %v590, %v595
    %599 = vrot.lane.b32.xlu0 %v597, 32
    %v600 = vpop.permute.xlu0 %599
    %v602 = vadd.f32 %v592, %v600
    %v603 = vtanh.pop %v602
    %605 = vrot.lane.b32.xlu0 %v603, 64
    %v606 = vpop.permute.xlu0 %605
    %v608 = vmul.f32 %v590, %v606
    %610 = vrot.lane.b32.xlu0 %v608, 32
    %v611 = vpop.permute.xlu0 %610
    %613 = vrot.lane.b32.xlu0 %v575, 64
    %v614 = vpop.permute.xlu0 %613
    %v616 = vsel %vm79, %v611, %v614
    %v618 = vsel %vm192, %v616, 0
    %620 = vmatprep.subr.mxu0 %v53
    %621 = vmatpush1.msra.mxu0 %v52
    %622 = vmatprep.subr.mxu0 %v55
    %623 = vmatpush1.msra.mxu0 %v54
    %624 = vmatprep.subr.mxu0 %v57
    %625 = vmatpush1.msra.mxu0 %v56
    %626 = vmatprep.subr.mxu0 %v59
    %627 = vmatpush1.msra.mxu0 %v58
    %628 = vmatprep.subr.mxu0 %v61
    %629 = vmatpush1.msra.mxu0 %v60
    %630 = vmatprep.subr.mxu0 %v63
    %631 = vmatpush1.msra.mxu0 %v62
    %632 = vmatprep.subr.mxu0 %v65
    %633 = vmatpush1.msra.mxu0 %v64
    %634 = vmatprep.subr.mxu0 %v67
    %635 = vmatpush1.msra.mxu0 %v66
    %636 = vmatprep.subr.mxu0 0.0
    %637 = vmatpush1.msra.mxu0 0.0
    %638 = vmatprep.subr.mxu0 0.0
    %639 = vmatpush1.msra.mxu0 0.0
    %640 = vmatprep.subr.mxu0 0.0
    %641 = vmatpush1.msra.mxu0 0.0
    %642 = vmatprep.subr.mxu0 0.0
    %643 = vmatpush1.msra.mxu0 0.0
    %644 = vmatprep.subr.mxu0 0.0
    %645 = vmatpush1.msra.mxu0 0.0
    %646 = vmatprep.subr.mxu0 0.0
    %647 = vmatpush1.msra.mxu0 0.0
    %648 = vmatprep.subr.mxu0 0.0
    %649 = vmatpush1.msra.mxu0 0.0
    %650 = vmatprep.subr.mxu0 0.0
    %651 = vmatpush1.msra.mxu0 0.0
    %652 = vmatprep.subr.mxu0 0.0
    %653 = vmatpush1.msra.mxu0 0.0
    %654 = vmatprep.subr.mxu0 0.0
    %655 = vmatpush1.msra.mxu0 0.0
    %656 = vmatprep.subr.mxu0 0.0
    %657 = vmatpush1.msra.mxu0 0.0
    %658 = vmatprep.subr.mxu0 0.0
    %659 = vmatpush1.msra.mxu0 0.0
    %660 = vmatprep.subr.mxu0 0.0
    %661 = vmatpush1.msra.mxu0 0.0
    %662 = vmatprep.subr.mxu0 0.0
    %663 = vmatpush1.msra.mxu0 0.0
    %664 = vmatprep.subr.mxu0 0.0
    %665 = vmatpush1.msra.mxu0 0.0
    %666 = vmatprep.subr.mxu0 0.0
    %667 = vmatpush1.msra.mxu0 0.0
    %668 = vmatprep.subr.mxu0 0.0
    %669 = vmatpush1.msra.mxu0 0.0
    %670 = vmatprep.subr.mxu0 0.0
    %671 = vmatpush1.msra.mxu0 0.0
    %672 = vmatprep.subr.mxu0 0.0
    %673 = vmatpush1.msra.mxu0 0.0
    %674 = vmatprep.subr.mxu0 0.0
    %675 = vmatpush1.msra.mxu0 0.0
    %676 = vmatprep.subr.mxu0 0.0
    %677 = vmatpush1.msra.mxu0 0.0
    %678 = vmatprep.subr.mxu0 0.0
    %679 = vmatpush1.msra.mxu0 0.0
    %680 = vmatprep.subr.mxu0 0.0
    %681 = vmatpush1.msra.mxu0 0.0
    %682 = vmatprep.subr.mxu0 0.0
    %683 = vmatpush1.msra.mxu0 0.0
    %684 = vmatprep.mubr.f32.mxu0 0.0
    %685 = vmatmul.mubr.f32.gmra.mrb[0].mxu0 %v618
    %v686 = vpop.f32.mrb[0].mxu0
    %v687 = vadd.f32 0.0, %v686
    %v688 = vpop.f32.mrb[0].mxu0
    %v689 = vadd.f32 0.0, %v688
    %690 = vdwg.mxu0
    %v691 = vadd.f32 %v689, %v73
    %v692 = vxor.u32 %v691, 2147483648
    %v693 = vmul.f32 %v692, 1.442695
    %v694 = vpow.pop %v693
    %v695 = vadd.f32 %v694, 1.0
    %v696 = vrcp.pop %v695
    %v697 = vmul.f32 1.0, %v696
    %v698 = vtanh.pop %v691
    %v699 = vmul.f32 %v697, %v569
    %701 = vrot.lane.b32.xlu0 %v698, 64
    %v702 = vpop.permute.xlu0 %701
    %v704 = vmul.f32 %v697, %v702
    %706 = vrot.lane.b32.xlu0 %v704, 32
    %v707 = vpop.permute.xlu0 %706
    %v709 = vadd.f32 %v699, %v707
    %v710 = vtanh.pop %v709
    %712 = vrot.lane.b32.xlu0 %v710, 64
    %v713 = vpop.permute.xlu0 %712
    %v715 = vmul.f32 %v697, %v713
    %717 = vrot.lane.b32.xlu0 %v715, 32
    %v718 = vpop.permute.xlu0 %717
    %s720 = scalar_lea.vmem [#allocation11], 6
    %721 = vst.msk [vmem:[%s720] sm:$0x3] %vm300, %v718
    %s722 = scalar_lea.vmem [#allocation6], 8
    %v723 = vld [vmem:[%s722] sm:$0x3]
    %v724 = vadd.f32 %v723, %v687
    %v725 = vxor.u32 %v724, 2147483648
    %v726 = vmul.f32 %v725, 1.442695
    %v727 = vpow.pop %v726
    %v728 = vadd.f32 %v727, 1.0
    %v729 = vrcp.pop %v728
    %v730 = vmul.f32 1.0, %v729
    %v731 = vtanh.pop %v724
    %v732 = vmul.f32 %v730, %v602
    %734 = vrot.lane.b32.xlu0 %v731, 64
    %v735 = vpop.permute.xlu0 %734
    %v737 = vmul.f32 %v730, %v735
    %739 = vrot.lane.b32.xlu0 %v737, 32
    %v740 = vpop.permute.xlu0 %739
    %v742 = vadd.f32 %v732, %v740
    %v743 = vtanh.pop %v742
    %745 = vrot.lane.b32.xlu0 %v743, 64
    %v746 = vpop.permute.xlu0 %745
    %v748 = vmul.f32 %v730, %v746
    %750 = vrot.lane.b32.xlu0 %v748, 32
    %v751 = vpop.permute.xlu0 %750
    %753 = vrot.lane.b32.xlu0 %v715, 64
    %v754 = vpop.permute.xlu0 %753
    %v756 = vsel %vm79, %v751, %v754
    %v758 = vsel %vm192, %v756, 0
    %760 = vmatprep.subr.mxu0 %v53
    %761 = vmatpush1.msra.mxu0 %v52
    %762 = vmatprep.subr.mxu0 %v55
    %763 = vmatpush1.msra.mxu0 %v54
    %764 = vmatprep.subr.mxu0 %v57
    %765 = vmatpush1.msra.mxu0 %v56
    %766 = vmatprep.subr.mxu0 %v59
    %767 = vmatpush1.msra.mxu0 %v58
    %768 = vmatprep.subr.mxu0 %v61
    %769 = vmatpush1.msra.mxu0 %v60
    %770 = vmatprep.subr.mxu0 %v63
    %771 = vmatpush1.msra.mxu0 %v62
    %772 = vmatprep.subr.mxu0 %v65
    %773 = vmatpush1.msra.mxu0 %v64
    %774 = vmatprep.subr.mxu0 %v67
    %775 = vmatpush1.msra.mxu0 %v66
    %776 = vmatprep.subr.mxu0 0.0
    %777 = vmatpush1.msra.mxu0 0.0
    %778 = vmatprep.subr.mxu0 0.0
    %779 = vmatpush1.msra.mxu0 0.0
    %780 = vmatprep.subr.mxu0 0.0
    %781 = vmatpush1.msra.mxu0 0.0
    %782 = vmatprep.subr.mxu0 0.0
    %783 = vmatpush1.msra.mxu0 0.0
    %784 = vmatprep.subr.mxu0 0.0
    %785 = vmatpush1.msra.mxu0 0.0
    %786 = vmatprep.subr.mxu0 0.0
    %787 = vmatpush1.msra.mxu0 0.0
    %788 = vmatprep.subr.mxu0 0.0
    %789 = vmatpush1.msra.mxu0 0.0
    %790 = vmatprep.subr.mxu0 0.0
    %791 = vmatpush1.msra.mxu0 0.0
    %792 = vmatprep.subr.mxu0 0.0
    %793 = vmatpush1.msra.mxu0 0.0
    %794 = vmatprep.subr.mxu0 0.0
    %795 = vmatpush1.msra.mxu0 0.0
    %796 = vmatprep.subr.mxu0 0.0
    %797 = vmatpush1.msra.mxu0 0.0
    %798 = vmatprep.subr.mxu0 0.0
    %799 = vmatpush1.msra.mxu0 0.0
    %800 = vmatprep.subr.mxu0 0.0
    %801 = vmatpush1.msra.mxu0 0.0
    %802 = vmatprep.subr.mxu0 0.0
    %803 = vmatpush1.msra.mxu0 0.0
    %804 = vmatprep.subr.mxu0 0.0
    %805 = vmatpush1.msra.mxu0 0.0
    %806 = vmatprep.subr.mxu0 0.0
    %807 = vmatpush1.msra.mxu0 0.0
    %808 = vmatprep.subr.mxu0 0.0
    %809 = vmatpush1.msra.mxu0 0.0
    %810 = vmatprep.subr.mxu0 0.0
    %811 = vmatpush1.msra.mxu0 0.0
    %812 = vmatprep.subr.mxu0 0.0
    %813 = vmatpush1.msra.mxu0 0.0
    %814 = vmatprep.subr.mxu0 0.0
    %815 = vmatpush1.msra.mxu0 0.0
    %816 = vmatprep.subr.mxu0 0.0
    %817 = vmatpush1.msra.mxu0 0.0
    %818 = vmatprep.subr.mxu0 0.0
    %819 = vmatpush1.msra.mxu0 0.0
    %820 = vmatprep.subr.mxu0 0.0
    %821 = vmatpush1.msra.mxu0 0.0
    %822 = vmatprep.subr.mxu0 0.0
    %823 = vmatpush1.msra.mxu0 0.0
    %824 = vmatprep.mubr.f32.mxu0 0.0
    %825 = vmatmul.mubr.f32.gmra.mrb[0].mxu0 %v758
    %v826 = vpop.f32.mrb[0].mxu0
    %v827 = vadd.f32 0.0, %v826
    %v828 = vpop.f32.mrb[0].mxu0
    %v829 = vadd.f32 0.0, %v828
    %830 = vdwg.mxu0
    %v831 = vadd.f32 %v829, %v73
    %v832 = vxor.u32 %v831, 2147483648
    %v833 = vmul.f32 %v832, 1.442695
    %v834 = vpow.pop %v833
    %v835 = vadd.f32 %v834, 1.0
    %v836 = vrcp.pop %v835
    %v837 = vmul.f32 1.0, %v836
    %v838 = vtanh.pop %v831
    %v839 = vmul.f32 %v837, %v709
    %841 = vrot.lane.b32.xlu0 %v838, 64
    %v842 = vpop.permute.xlu0 %841
    %v844 = vmul.f32 %v837, %v842
    %846 = vrot.lane.b32.xlu0 %v844, 32
    %v847 = vpop.permute.xlu0 %846
    %v849 = vadd.f32 %v839, %v847
    %v850 = vtanh.pop %v849
    %852 = vrot.lane.b32.xlu0 %v850, 64
    %v853 = vpop.permute.xlu0 %852
    %v855 = vmul.f32 %v837, %v853
    %857 = vrot.lane.b32.xlu0 %v855, 32
    %v858 = vpop.permute.xlu0 %857
    %s860 = scalar_lea.vmem [#allocation11], 8
    %861 = vst.msk [vmem:[%s860] sm:$0x3] %vm300, %v858
    %s862 = scalar_lea.vmem [#allocation6], 10
    %v863 = vld [vmem:[%s862] sm:$0x3]
    %v864 = vadd.f32 %v863, %v827
    %v865 = vxor.u32 %v864, 2147483648
    %v866 = vmul.f32 %v865, 1.442695
    %v867 = vpow.pop %v866
    %v868 = vadd.f32 %v867, 1.0
    %v869 = vrcp.pop %v868
    %v870 = vmul.f32 1.0, %v869
    %v871 = vtanh.pop %v864
    %v872 = vmul.f32 %v870, %v742
    %874 = vrot.lane.b32.xlu0 %v871, 64
    %v875 = vpop.permute.xlu0 %874
    %v877 = vmul.f32 %v870, %v875
    %879 = vrot.lane.b32.xlu0 %v877, 32
    %v880 = vpop.permute.xlu0 %879
    %v882 = vadd.f32 %v872, %v880
    %v883 = vtanh.pop %v882
    %885 = vrot.lane.b32.xlu0 %v883, 64
    %v886 = vpop.permute.xlu0 %885
    %v888 = vmul.f32 %v870, %v886
    %890 = vrot.lane.b32.xlu0 %v888, 32
    %v891 = vpop.permute.xlu0 %890
    %893 = vrot.lane.b32.xlu0 %v855, 64
    %v894 = vpop.permute.xlu0 %893
    %v896 = vsel %vm79, %v891, %v894
    %v898 = vsel %vm192, %v896, 0
    %900 = vmatprep.subr.mxu0 %v53
    %901 = vmatpush1.msra.mxu0 %v52
    %902 = vmatprep.subr.mxu0 %v55
    %903 = vmatpush1.msra.mxu0 %v54
    %904 = vmatprep.subr.mxu0 %v57
    %905 = vmatpush1.msra.mxu0 %v56
    %906 = vmatprep.subr.mxu0 %v59
    %907 = vmatpush1.msra.mxu0 %v58
    %908 = vmatprep.subr.mxu0 %v61
    %909 = vmatpush1.msra.mxu0 %v60
    %910 = vmatprep.subr.mxu0 %v63
    %911 = vmatpush1.msra.mxu0 %v62
    %912 = vmatprep.subr.mxu0 %v65
    %913 = vmatpush1.msra.mxu0 %v64
    %914 = vmatprep.subr.mxu0 %v67
    %915 = vmatpush1.msra.mxu0 %v66
    %916 = vmatprep.subr.mxu0 0.0
    %917 = vmatpush1.msra.mxu0 0.0
    %918 = vmatprep.subr.mxu0 0.0
    %919 = vmatpush1.msra.mxu0 0.0
    %920 = vmatprep.subr.mxu0 0.0
    %921 = vmatpush1.msra.mxu0 0.0
    %922 = vmatprep.subr.mxu0 0.0
    %923 = vmatpush1.msra.mxu0 0.0
    %924 = vmatprep.subr.mxu0 0.0
    %925 = vmatpush1.msra.mxu0 0.0
    %926 = vmatprep.subr.mxu0 0.0
    %927 = vmatpush1.msra.mxu0 0.0
    %928 = vmatprep.subr.mxu0 0.0
    %929 = vmatpush1.msra.mxu0 0.0
    %930 = vmatprep.subr.mxu0 0.0
    %931 = vmatpush1.msra.mxu0 0.0
    %932 = vmatprep.subr.mxu0 0.0
    %933 = vmatpush1.msra.mxu0 0.0
    %934 = vmatprep.subr.mxu0 0.0
    %935 = vmatpush1.msra.mxu0 0.0
    %936 = vmatprep.subr.mxu0 0.0
    %937 = vmatpush1.msra.mxu0 0.0
    %938 = vmatprep.subr.mxu0 0.0
    %939 = vmatpush1.msra.mxu0 0.0
    %940 = vmatprep.subr.mxu0 0.0
    %941 = vmatpush1.msra.mxu0 0.0
    %942 = vmatprep.subr.mxu0 0.0
    %943 = vmatpush1.msra.mxu0 0.0
    %944 = vmatprep.subr.mxu0 0.0
    %945 = vmatpush1.msra.mxu0 0.0
    %946 = vmatprep.subr.mxu0 0.0
    %947 = vmatpush1.msra.mxu0 0.0
    %948 = vmatprep.subr.mxu0 0.0
    %949 = vmatpush1.msra.mxu0 0.0
    %950 = vmatprep.subr.mxu0 0.0
    %951 = vmatpush1.msra.mxu0 0.0
    %952 = vmatprep.subr.mxu0 0.0
    %953 = vmatpush1.msra.mxu0 0.0
    %954 = vmatprep.subr.mxu0 0.0
    %955 = vmatpush1.msra.mxu0 0.0
    %956 = vmatprep.subr.mxu0 0.0
    %957 = vmatpush1.msra.mxu0 0.0
    %958 = vmatprep.subr.mxu0 0.0
    %959 = vmatpush1.msra.mxu0 0.0
    %960 = vmatprep.subr.mxu0 0.0
    %961 = vmatpush1.msra.mxu0 0.0
    %962 = vmatprep.subr.mxu0 0.0
    %963 = vmatpush1.msra.mxu0 0.0
    %964 = vmatprep.mubr.f32.mxu0 0.0
    %965 = vmatmul.mubr.f32.gmra.mrb[0].mxu0 %v898
    %v966 = vpop.f32.mrb[0].mxu0
    %v967 = vadd.f32 0.0, %v966
    %v968 = vpop.f32.mrb[0].mxu0
    %v969 = vadd.f32 0.0, %v968
    %970 = vdwg.mxu0
    %v971 = vadd.f32 %v969, %v73
    %v972 = vxor.u32 %v971, 2147483648
    %v973 = vmul.f32 %v972, 1.442695
    %v974 = vpow.pop %v973
    %v975 = vadd.f32 %v974, 1.0
    %v976 = vrcp.pop %v975
    %v977 = vmul.f32 1.0, %v976
    %v978 = vtanh.pop %v971
    %v979 = vmul.f32 %v977, %v849
    %981 = vrot.lane.b32.xlu0 %v978, 64
    %v982 = vpop.permute.xlu0 %981
    %v984 = vmul.f32 %v977, %v982
    %986 = vrot.lane.b32.xlu0 %v984, 32
    %v987 = vpop.permute.xlu0 %986
    %v989 = vadd.f32 %v979, %v987
    %v990 = vtanh.pop %v989
    %992 = vrot.lane.b32.xlu0 %v990, 64
    %v993 = vpop.permute.xlu0 %992
    %v995 = vmul.f32 %v977, %v993
    %997 = vrot.lane.b32.xlu0 %v995, 32
    %v998 = vpop.permute.xlu0 %997
    %s1000 = scalar_lea.vmem [#allocation11], 10
    %1001 = vst.msk [vmem:[%s1000] sm:$0x3] %vm300, %v998
    %s1002 = scalar_lea.vmem [#allocation6], 12
    %v1003 = vld [vmem:[%s1002] sm:$0x3]
    %v1004 = vadd.f32 %v1003, %v967
    %v1005 = vxor.u32 %v1004, 2147483648
    %v1006 = vmul.f32 %v1005, 1.442695
    %v1007 = vpow.pop %v1006
    %v1008 = vadd.f32 %v1007, 1.0
    %v1009 = vrcp.pop %v1008
    %v1010 = vmul.f32 1.0, %v1009
    %v1011 = vtanh.pop %v1004
    %v1012 = vmul.f32 %v1010, %v882
    %1014 = vrot.lane.b32.xlu0 %v1011, 64
    %v1015 = vpop.permute.xlu0 %1014
    %v1017 = vmul.f32 %v1010, %v1015
    %1019 = vrot.lane.b32.xlu0 %v1017, 32
    %v1020 = vpop.permute.xlu0 %1019
    %v1022 = vadd.f32 %v1012, %v1020
    %v1023 = vtanh.pop %v1022
    %1025 = vrot.lane.b32.xlu0 %v1023, 64
    %v1026 = vpop.permute.xlu0 %1025
    %v1028 = vmul.f32 %v1010, %v1026
    %1030 = vrot.lane.b32.xlu0 %v1028, 32
    %v1031 = vpop.permute.xlu0 %1030
    %1033 = vrot.lane.b32.xlu0 %v995, 64
    %v1034 = vpop.permute.xlu0 %1033
    %v1036 = vsel %vm79, %v1031, %v1034
    %v1038 = vsel %vm192, %v1036, 0
    %1040 = vmatprep.subr.mxu0 %v53
    %1041 = vmatpush1.msra.mxu0 %v52
    %1042 = vmatprep.subr.mxu0 %v55
    %1043 = vmatpush1.msra.mxu0 %v54
    %1044 = vmatprep.subr.mxu0 %v57
    %1045 = vmatpush1.msra.mxu0 %v56
    %1046 = vmatprep.subr.mxu0 %v59
    %1047 = vmatpush1.msra.mxu0 %v58
    %1048 = vmatprep.subr.mxu0 %v61
    %1049 = vmatpush1.msra.mxu0 %v60
    %1050 = vmatprep.subr.mxu0 %v63
    %1051 = vmatpush1.msra.mxu0 %v62
    %1052 = vmatprep.subr.mxu0 %v65
    %1053 = vmatpush1.msra.mxu0 %v64
    %1054 = vmatprep.subr.mxu0 %v67
    %1055 = vmatpush1.msra.mxu0 %v66
    %1056 = vmatprep.subr.mxu0 0.0
    %1057 = vmatpush1.msra.mxu0 0.0
    %1058 = vmatprep.subr.mxu0 0.0
    %1059 = vmatpush1.msra.mxu0 0.0
    %1060 = vmatprep.subr.mxu0 0.0
    %1061 = vmatpush1.msra.mxu0 0.0
    %1062 = vmatprep.subr.mxu0 0.0
    %1063 = vmatpush1.msra.mxu0 0.0
    %1064 = vmatprep.subr.mxu0 0.0
    %1065 = vmatpush1.msra.mxu0 0.0
    %1066 = vmatprep.subr.mxu0 0.0
    %1067 = vmatpush1.msra.mxu0 0.0
    %1068 = vmatprep.subr.mxu0 0.0
    %1069 = vmatpush1.msra.mxu0 0.0
    %1070 = vmatprep.subr.mxu0 0.0
    %1071 = vmatpush1.msra.mxu0 0.0
    %1072 = vmatprep.subr.mxu0 0.0
    %1073 = vmatpush1.msra.mxu0 0.0
    %1074 = vmatprep.subr.mxu0 0.0
    %1075 = vmatpush1.msra.mxu0 0.0
    %1076 = vmatprep.subr.mxu0 0.0
    %1077 = vmatpush1.msra.mxu0 0.0
    %1078 = vmatprep.subr.mxu0 0.0
    %1079 = vmatpush1.msra.mxu0 0.0
    %1080 = vmatprep.subr.mxu0 0.0
    %1081 = vmatpush1.msra.mxu0 0.0
    %1082 = vmatprep.subr.mxu0 0.0
    %1083 = vmatpush1.msra.mxu0 0.0
    %1084 = vmatprep.subr.mxu0 0.0
    %1085 = vmatpush1.msra.mxu0 0.0
    %1086 = vmatprep.subr.mxu0 0.0
    %1087 = vmatpush1.msra.mxu0 0.0
    %1088 = vmatprep.subr.mxu0 0.0
    %1089 = vmatpush1.msra.mxu0 0.0
    %1090 = vmatprep.subr.mxu0 0.0
    %1091 = vmatpush1.msra.mxu0 0.0
    %1092 = vmatprep.subr.mxu0 0.0
    %1093 = vmatpush1.msra.mxu0 0.0
    %1094 = vmatprep.subr.mxu0 0.0
    %1095 = vmatpush1.msra.mxu0 0.0
    %1096 = vmatprep.subr.mxu0 0.0
    %1097 = vmatpush1.msra.mxu0 0.0
    %1098 = vmatprep.subr.mxu0 0.0
    %1099 = vmatpush1.msra.mxu0 0.0
    %1100 = vmatprep.subr.mxu0 0.0
    %1101 = vmatpush1.msra.mxu0 0.0
    %1102 = vmatprep.subr.mxu0 0.0
    %1103 = vmatpush1.msra.mxu0 0.0
    %1104 = vmatprep.mubr.f32.mxu0 0.0
    %1105 = vmatmul.mubr.f32.gmra.mrb[0].mxu0 %v1038
    %v1106 = vpop.f32.mrb[0].mxu0
    %v1107 = vadd.f32 0.0, %v1106
    %v1108 = vpop.f32.mrb[0].mxu0
    %v1109 = vadd.f32 0.0, %v1108
    %1110 = vdwg.mxu0
    %v1111 = vadd.f32 %v1109, %v73
    %v1112 = vxor.u32 %v1111, 2147483648
    %v1113 = vmul.f32 %v1112, 1.442695
    %v1114 = vpow.pop %v1113
    %v1115 = vadd.f32 %v1114, 1.0
    %v1116 = vrcp.pop %v1115
    %v1117 = vmul.f32 1.0, %v1116
    %v1118 = vtanh.pop %v1111
    %v1119 = vmul.f32 %v1117, %v989
    %1121 = vrot.lane.b32.xlu0 %v1118, 64
    %v1122 = vpop.permute.xlu0 %1121
    %v1124 = vmul.f32 %v1117, %v1122
    %1126 = vrot.lane.b32.xlu0 %v1124, 32
    %v1127 = vpop.permute.xlu0 %1126
    %v1129 = vadd.f32 %v1119, %v1127
    %v1130 = vtanh.pop %v1129
    %1132 = vrot.lane.b32.xlu0 %v1130, 64
    %v1133 = vpop.permute.xlu0 %1132
    %v1135 = vmul.f32 %v1117, %v1133
    %1137 = vrot.lane.b32.xlu0 %v1135, 32
    %v1138 = vpop.permute.xlu0 %1137
    %s1140 = scalar_lea.vmem [#allocation11], 12
    %1141 = vst.msk [vmem:[%s1140] sm:$0x3] %vm300, %v1138
    %s1142 = scalar_lea.vmem [#allocation6], 14
    %v1143 = vld [vmem:[%s1142] sm:$0x3]
    %v1144 = vadd.f32 %v1143, %v1107
    %v1145 = vxor.u32 %v1144, 2147483648
    %v1146 = vmul.f32 %v1145, 1.442695
    %v1147 = vpow.pop %v1146
    %v1148 = vadd.f32 %v1147, 1.0
    %v1149 = vrcp.pop %v1148
    %v1150 = vmul.f32 1.0, %v1149
    %v1151 = vtanh.pop %v1144
    %v1152 = vmul.f32 %v1150, %v1022
    %1154 = vrot.lane.b32.xlu0 %v1151, 64
    %v1155 = vpop.permute.xlu0 %1154
    %v1157 = vmul.f32 %v1150, %v1155
    %1159 = vrot.lane.b32.xlu0 %v1157, 32
    %v1160 = vpop.permute.xlu0 %1159
    %v1162 = vadd.f32 %v1152, %v1160
    %v1163 = vtanh.pop %v1162
    %1165 = vrot.lane.b32.xlu0 %v1163, 64
    %v1166 = vpop.permute.xlu0 %1165
    %v1168 = vmul.f32 %v1150, %v1166
    %1170 = vrot.lane.b32.xlu0 %v1168, 32
    %v1171 = vpop.permute.xlu0 %1170
    %1173 = vrot.lane.b32.xlu0 %v1135, 64
    %v1174 = vpop.permute.xlu0 %1173
    %v1176 = vsel %vm79, %v1171, %v1174
    %v1178 = vsel %vm192, %v1176, 0
    %1180 = vmatprep.subr.mxu0 0.0
    %1181 = vmatpush1.msra.mxu0 %v53
    %1182 = vmatprep.subr.mxu0 0.0
    %1183 = vmatpush1.msra.mxu0 %v55
    %1184 = vmatprep.subr.mxu0 0.0
    %1185 = vmatpush1.msra.mxu0 %v57
    %1186 = vmatprep.subr.mxu0 0.0
    %1187 = vmatpush1.msra.mxu0 %v59
    %1188 = vmatprep.subr.mxu0 0.0
    %1189 = vmatpush1.msra.mxu0 %v61
    %1190 = vmatprep.subr.mxu0 0.0
    %1191 = vmatpush1.msra.mxu0 %v63
    %1192 = vmatprep.subr.mxu0 0.0
    %1193 = vmatpush1.msra.mxu0 %v65
    %1194 = vmatprep.subr.mxu0 0.0
    %1195 = vmatpush1.msra.mxu0 %v67
    %1196 = vmatprep.subr.mxu0 0.0
    %1197 = vmatpush1.msra.mxu0 0.0
    %1198 = vmatprep.subr.mxu0 0.0
    %1199 = vmatpush1.msra.mxu0 0.0
    %1200 = vmatprep.subr.mxu0 0.0
    %1201 = vmatpush1.msra.mxu0 0.0
    %1202 = vmatprep.subr.mxu0 0.0
    %1203 = vmatpush1.msra.mxu0 0.0
    %1204 = vmatprep.subr.mxu0 0.0
    %1205 = vmatpush1.msra.mxu0 0.0
    %1206 = vmatprep.subr.mxu0 0.0
    %1207 = vmatpush1.msra.mxu0 0.0
    %1208 = vmatprep.subr.mxu0 0.0
    %1209 = vmatpush1.msra.mxu0 0.0
    %1210 = vmatprep.subr.mxu0 0.0
    %1211 = vmatpush1.msra.mxu0 0.0
    %1212 = vmatprep.subr.mxu0 0.0
    %1213 = vmatpush1.msra.mxu0 0.0
    %1214 = vmatprep.subr.mxu0 0.0
    %1215 = vmatpush1.msra.mxu0 0.0
    %1216 = vmatprep.subr.mxu0 0.0
    %1217 = vmatpush1.msra.mxu0 0.0
    %1218 = vmatprep.subr.mxu0 0.0
    %1219 = vmatpush1.msra.mxu0 0.0
    %1220 = vmatprep.subr.mxu0 0.0
    %1221 = vmatpush1.msra.mxu0 0.0
    %1222 = vmatprep.subr.mxu0 0.0
    %1223 = vmatpush1.msra.mxu0 0.0
    %1224 = vmatprep.subr.mxu0 0.0
    %1225 = vmatpush1.msra.mxu0 0.0
    %1226 = vmatprep.subr.mxu0 0.0
    %1227 = vmatpush1.msra.mxu0 0.0
    %1228 = vmatprep.subr.mxu0 0.0
    %1229 = vmatpush1.msra.mxu0 0.0
    %1230 = vmatprep.subr.mxu0 0.0
    %1231 = vmatpush1.msra.mxu0 0.0
    %1232 = vmatprep.subr.mxu0 0.0
    %1233 = vmatpush1.msra.mxu0 0.0
    %1234 = vmatprep.subr.mxu0 0.0
    %1235 = vmatpush1.msra.mxu0 0.0
    %1236 = vmatprep.subr.mxu0 0.0
    %1237 = vmatpush1.msra.mxu0 0.0
    %1238 = vmatprep.subr.mxu0 0.0
    %1239 = vmatpush1.msra.mxu0 0.0
    %1240 = vmatprep.subr.mxu0 0.0
    %1241 = vmatpush1.msra.mxu0 0.0
    %1242 = vmatprep.subr.mxu0 0.0
    %1243 = vmatpush1.msra.mxu0 0.0
    %1244 = vmatprep.mubr.f32.mxu0 0.0
    %1245 = vmatmul.mubr.f32.gmra.mrb[0].mxu0 %v1178
    %v1246 = vpop.f32.mrb[0].mxu0
    %v1247 = vadd.f32 %v73, %v1246
    %v1248 = vpop.f32.mrb[0].mxu0
    %1249 = vdwg.mxu0
    %v1250 = vxor.u32 %v1247, 2147483648
    %v1251 = vmul.f32 %v1250, 1.442695
    %v1252 = vpow.pop %v1251
    %v1253 = vadd.f32 %v1252, 1.0
    %v1254 = vrcp.pop %v1253
    %v1255 = vmul.f32 1.0, %v1254
    %v1256 = vtanh.pop %v1247
    %v1257 = vmul.f32 %v1255, %v1129
    %1259 = vrot.lane.b32.xlu0 %v1256, 64
    %v1260 = vpop.permute.xlu0 %1259
    %v1262 = vmul.f32 %v1255, %v1260
    %1264 = vrot.lane.b32.xlu0 %v1262, 32
    %v1265 = vpop.permute.xlu0 %1264
    %v1267 = vadd.f32 %v1257, %v1265
    %v1268 = vtanh.pop %v1267
    %1270 = vrot.lane.b32.xlu0 %v1268, 64
    %v1271 = vpop.permute.xlu0 %1270
    %v1273 = vmul.f32 %v1255, %v1271
    %1275 = vrot.lane.b32.xlu0 %v1273, 32
    %v1276 = vpop.permute.xlu0 %1275
    %s1278 = scalar_lea.vmem [#allocation11], 14
    %1279 = vst.msk [vmem:[%s1278] sm:$0x3] %vm300, %v1276
    %1280 = vst.msk [vmem:[#allocation2] sm:$0x3] %vm300, %v1171
    %1282 = vrot.lane.b32.xlu0 %v1162, 96
    %v1283 = vpop.permute.xlu0 %1282
    %1285 = vst.msk [vmem:[#allocation3] sm:$0x3] %vm300, %v1283
    %1286 = vst.msk [vmem:[#allocation4] sm:$0x3] %vm300, %v1276
    %1288 = vrot.lane.b32.xlu0 %v1267, 96
    %v1289 = vpop.permute.xlu0 %1288
    %1291 = vst.msk [vmem:[#allocation5] sm:$0x3] %vm300, %v1289
    // Predicated region
    $region26: #{tpu_custom_call.1} parent=1 // pred_check
      _
    $region27: #{tpu_custom_call.1} parent=1 // pred_check_branch
      %1293 = sbr.rel (0) target = $region29
    $region28: #{tpu_custom_call.1} parent=1 // pred_region
      %s1295 = ssub.s32 256, 256
      %1296 = vsyncadd [#allocation8], %s1295
      %s1297 = sshll.u32 [#allocation11], 4
      %s1298 = int_to_ptr.vmem [resolvable:$true] %s1297
      %1303 = dma.vmem_to_hbm [thread:$0]  %s1298, 256, %s3, [#allocation8], 32, 32, 2
    $region29: #{tpu_custom_call.1} parent=1 // pred_fallthru
      _
    // Predicated region
    $region30: #{tpu_custom_call.1} parent=1 // pred_check
      _
    $region31: #{tpu_custom_call.1} parent=1 // pred_check_branch
      %1305 = sbr.rel (0) target = $region33
    $region32: #{tpu_custom_call.1} parent=1 // pred_region
      %1306 = dma.done [#allocation8], 256
    $region33: #{tpu_custom_call.1} parent=1 // pred_fallthru
      _
    %1307 = vsyncpa [#allocation7], 1
    %1308 = vsyncpa [#allocation10], 1
    %1309 = vsyncpa [#allocation8], 1

</llo_original>
